<compile_context>
chip_gen: v6e
topology: v6e:2x2x1
jax: 0.10.0
libtpu: 0.0.40
codegen_flags: <defaults>
</compile_context>

<pallas_src>
import functools

import jax
import jax.numpy as jnp
from jax.experimental import pallas as pl
from jax.experimental.pallas import tpu as pltpu


VMEM_LIMIT = 32 * 1024 * 1024  # safe on v5e (128 MiB), v6e (128 MiB), v7x (64 MiB)


def _round_up(x, m):
    return (x + m - 1) // m * m


# ----------------------------- Pallas kernels ------------------------------


def _linear_kernel(x_ref, w_ref, b_ref, o_ref):
    # o = x @ w + b      x:(tm,K)  w:(K,N)  b:(1,N)   (f32 accumulation)
    o_ref[...] = (
        jnp.dot(x_ref[...], w_ref[...], preferred_element_type=jnp.float32)
        + b_ref[...]
    ).astype(o_ref.dtype)


def linear(x, w_t, b, *, tile_m=512):
    """x:(M,K), w_t:(K,N) in compute dtype, b:(N,) f32 -> (M,N) f32.

    M-tiled, pipelined, 'parallel' grid axis. x is cast to w_t.dtype (bf16 on
    the perf path) so the MXU runs at bf16 rate with f32 accumulation.
    """
    M, K = x.shape
    _, N = w_t.shape
    x = x.astype(w_t.dtype)
    tm = min(tile_m, _round_up(M, 8))
    Mp = _round_up(M, tm)
    if Mp != M:
        x = jnp.pad(x, ((0, Mp - M), (0, 0)))
    out = pl.pallas_call(
        _linear_kernel,
        out_shape=jax.ShapeDtypeStruct((Mp, N), jnp.float32),
        grid=(Mp // tm,),
        in_specs=[
            pl.BlockSpec((tm, K), lambda i: (i, 0)),
            pl.BlockSpec((K, N), lambda i: (0, 0)),
            pl.BlockSpec((1, N), lambda i: (0, 0)),
        ],
        out_specs=pl.BlockSpec((tm, N), lambda i: (i, 0)),
        compiler_params=pltpu.CompilerParams(
            dimension_semantics=("parallel",),
            vmem_limit_bytes=VMEM_LIMIT,
        ),
    )(x, w_t, b.reshape(1, N).astype(jnp.float32))
    return out[:M] if Mp != M else out


def _lstm_rec_kernel(gx_ref, whh_hbm, o_ref, whh_vmem, h_sc, c_sc, sem):
    """Recurrence over a block of TIME_BLOCK steps.

    gx_ref: (tb, Bp, 4H) f32  -- precomputed x@W_ih^T + (b_ih+b_hh)
    whh_hbm: (H, 4H) raw ref  -- copied once into whh_vmem at t==0
    o_ref:  (tb, Bp, H)       -- h outputs (compute dtype)
    h_sc/c_sc: (Bp, H) f32 scratch carried across grid steps.
    """
    tc = pl.program_id(0)
    tb = gx_ref.shape[0]
    H = h_sc.shape[-1]

    @pl.when(tc == 0)
    def _():
        # Single-buffered, loop-invariant W_hh: one DMA for the whole sequence.
        cp = pltpu.make_async_copy(whh_hbm, whh_vmem, sem)
        cp.start()
        cp.wait()
        h_sc[...] = jnp.zeros_like(h_sc)
        c_sc[...] = jnp.zeros_like(c_sc)

    whh = whh_vmem[...]

    def step(i, carry):
        gates = gx_ref[i] + jnp.dot(
            h_sc[...].astype(whh.dtype), whh, preferred_element_type=jnp.float32
        )  # (Bp, 4H), PyTorch gate order i, f, g, o
        i_g = jax.nn.sigmoid(gates[:, 0:H])
        f_g = jax.nn.sigmoid(gates[:, H:2 * H])
        g_g = jnp.tanh(gates[:, 2 * H:3 * H])
        o_g = jax.nn.sigmoid(gates[:, 3 * H:4 * H])
        c_new = f_g * c_sc[...] + i_g * g_g
        h_new = o_g * jnp.tanh(c_new)
        c_sc[...] = c_new
        h_sc[...] = h_new
        o_ref[i] = h_new.astype(o_ref.dtype)
        return carry

    jax.lax.fori_loop(0, tb, step, 0, unroll=True)


def lstm_layer(gates_x, whh_t, *, time_block):
    """gates_x:(Tp,Bp,4H) f32, whh_t:(H,4H) compute dtype -> (Tp,Bp,H)."""
    Tp, Bp, H4 = gates_x.shape
    H = H4 // 4
    assert Tp % time_block == 0
    return pl.pallas_call(
        _lstm_rec_kernel,
        out_shape=jax.ShapeDtypeStruct((Tp, Bp, H), whh_t.dtype),
        grid=(Tp // time_block,),
        in_specs=[
            pl.BlockSpec((time_block, Bp, H4), lambda t: (t, 0, 0)),
            pl.BlockSpec(memory_space=pl.ANY),  # W_hh stays put; copied once
        ],
        out_specs=pl.BlockSpec((time_block, Bp, H), lambda t: (t, 0, 0)),
        scratch_shapes=[
            pltpu.VMEM((H, H4), whh_t.dtype),   # resident W_hh (single buffer)
            pltpu.VMEM((Bp, H), jnp.float32),   # h
            pltpu.VMEM((Bp, H), jnp.float32),   # c
            pltpu.SemaphoreType.DMA(()),
        ],
        compiler_params=pltpu.CompilerParams(
            dimension_semantics=("arbitrary",),  # sequential recurrence over T
            vmem_limit_bytes=VMEM_LIMIT,
        ),
    )(gates_x, whh_t)


def _fc_kernel(x_ref, w_ref, b_ref, o_ref):
    # N=1 head: VPU multiply + lane reduction (avoid a 1-column MXU matmul).
    o_ref[...] = (
        jnp.sum(x_ref[...] * w_ref[...], axis=-1, keepdims=True) + b_ref[...]
    )


def fc_head(x, w, b, *, tile_m=512):
    """x:(M,H) f32, w:(1,H) f32, b:(1,) f32 -> (M,1) f32."""
    M, H = x.shape
    tm = min(tile_m, _round_up(M, 8))
    Mp = _round_up(M, tm)
    if Mp != M:
        x = jnp.pad(x, ((0, Mp - M), (0, 0)))
    out = pl.pallas_call(
        _fc_kernel,
        out_shape=jax.ShapeDtypeStruct((Mp, 1), jnp.float32),
        grid=(Mp // tm,),
        in_specs=[
            pl.BlockSpec((tm, H), lambda i: (i, 0)),
            pl.BlockSpec((1, H), lambda i: (0, 0)),
            pl.BlockSpec((1, 1), lambda i: (0, 0)),
        ],
        out_specs=pl.BlockSpec((tm, 1), lambda i: (i, 0)),
        compiler_params=pltpu.CompilerParams(
            dimension_semantics=("parallel",),
            vmem_limit_bytes=VMEM_LIMIT,
        ),
    )(x, w, b.reshape(1, 1))
    return out[:M] if Mp != M else out


# ------------------------------- Model glue --------------------------------


def init_params(key, hidden_dim, n_layers, n_test, n_questions, n_tag):
    h3 = hidden_dim // 3
    keys = jax.random.split(key, 16)
    k = iter(keys)

    def rnd(shape):
        return 0.1 * jax.random.normal(next(k), shape, jnp.float32)

    params = {
        "emb_interaction": rnd((3, h3)),
        "emb_test": rnd((n_test + 1, h3)),
        "emb_question": rnd((n_questions + 1, h3)),
        "emb_tag": rnd((n_tag + 1, h3)),
        "comb_w": rnd((hidden_dim, h3 * 4)),   # nn.Linear: (out, in)
        "comb_b": rnd((hidden_dim,)),
        "fc_w": rnd((1, hidden_dim)),
        "fc_b": rnd((1,)),
        "lstm": [],
    }
    for _ in range(n_layers):
        params["lstm"].append(
            {
                "w_ih": rnd((4 * hidden_dim, hidden_dim)),
                "w_hh": rnd((4 * hidden_dim, hidden_dim)),
                "b_ih": rnd((4 * hidden_dim,)),
                "b_hh": rnd((4 * hidden_dim,)),
            }
        )
    return params


def prepare_params(params, compute_dtype):
    """One-time weight prep: transpose, fuse biases, cast matmul operands."""
    cd = compute_dtype
    prep = {
        "emb_interaction": params["emb_interaction"],
        "emb_test": params["emb_test"],
        "emb_question": params["emb_question"],
        "emb_tag": params["emb_tag"],
        "comb_w_t": params["comb_w"].T.astype(cd),          # (Din, H)
        "comb_b": params["comb_b"].astype(jnp.float32),
        "fc_w": params["fc_w"].astype(jnp.float32),          # (1, H)
        "fc_b": params["fc_b"].astype(jnp.float32),
        "lstm": [
            {
                "wih_t": lp["w_ih"].T.astype(cd),             # (Din, 4H)
                "whh_t": lp["w_hh"].T.astype(cd),             # (H, 4H)
                "b": (lp["b_ih"] + lp["b_hh"]).astype(jnp.float32),
            }
            for lp in params["lstm"]
        ],
    }
    return prep


@functools.partial(jax.jit, static_argnames=("hidden_dim", "time_block"))
def forward(prep, test, question, tag, mask, interaction, *, hidden_dim,
            time_block=8):
    del mask  # mask is unused in the reference forward
    B, T = interaction.shape
    H = hidden_dim

    # Embedding lookups (glue).
    embed = jnp.concatenate(
        [
            prep["emb_interaction"][interaction],
            prep["emb_test"][test],
            prep["emb_question"][question],
            prep["emb_tag"][tag],
        ],
        axis=2,
    ).astype(jnp.float32)  # (B, T, 4*(H//3))
    Din = embed.shape[-1]

    # comb_proj: one tiled Pallas matmul.
    X = linear(embed.reshape(B * T, Din), prep["comb_w_t"], prep["comb_b"])
    X = X.reshape(B, T, H)

    # Time-major, pad B to 8 sublanes and T to the time block.
    Tp = _round_up(T, time_block)
    Bp = _round_up(B, 8)
    x_tm = jnp.transpose(X, (1, 0, 2))                 # (T, B, H)
    x_tm = jnp.pad(x_tm, ((0, Tp - T), (0, Bp - B), (0, 0)))

    # Multi-layer LSTM: hoisted input projection + recurrence kernel.
    for lp in prep["lstm"]:
        gx = linear(x_tm.reshape(Tp * Bp, x_tm.shape[-1]), lp["wih_t"], lp["b"])
        gx = gx.reshape(Tp, Bp, 4 * H)
        x_tm = lstm_layer(gx, lp["whh_t"], time_block=time_block)

    # fc head (VPU multiply + lane reduce), then view(batch, -1).
    out = jnp.transpose(x_tm, (1, 0, 2))[:B, :T]       # (B, T, H)
    out = fc_head(out.reshape(B * T, H).astype(jnp.float32),
                  prep["fc_w"], prep["fc_b"])
    return out.reshape(B, T)


# Pure-JAX reference for verification (mirrors the compute-dtype casts so the
# bf16 path can be checked tightly; compute_dtype=float32 is the PyTorch-exact
# semantics).
def forward_ref(params, test, question, tag, mask, interaction, hidden_dim,
                compute_dtype):
    del mask
    B, T = interaction.shape
    H = hidden_dim
    cd = compute_dtype
    f32 = jnp.float32

    embed = jnp.concatenate(
        [
            params["emb_interaction"][interaction],
            params["emb_test"][test],
            params["emb_question"][question],
            params["emb_tag"][tag],
        ],
        axis=2,
    ).astype(f32)
    X = (
        jnp.dot(embed.astype(cd), params["comb_w"].T.astype(cd),
                preferred_element_type=f32)
        + params["comb_b"]
    )

    out = X
    for lp in params["lstm"]:
        wih_t = lp["w_ih"].T.astype(cd)
        whh_t = lp["w_hh"].T.astype(cd)
        b = (lp["b_ih"] + lp["b_hh"]).astype(f32)

        def step(carry, x_t, wih_t=wih_t, whh_t=whh_t, b=b):
            h, c = carry
            g = (
                jnp.dot(x_t.astype(cd), wih_t, preferred_element_type=f32)
                + b
                + jnp.dot(h.astype(cd), whh_t, preferred_element_type=f32)
            )
            i = jax.nn.sigmoid(g[:, :H])
            f = jax.nn.sigmoid(g[:, H:2 * H])
            gg = jnp.tanh(g[:, 2 * H:3 * H])
            o = jax.nn.sigmoid(g[:, 3 * H:4 * H])
            c = f * c + i * gg
            h = o * jnp.tanh(c)
            return (h, c), h

        h0 = jnp.zeros((B, H), f32)
        _, ys = jax.lax.scan(step, (h0, h0), jnp.transpose(out, (1, 0, 2)))
        # mirror the compute-dtype HBM round trip of the inter-layer activation
        out = jnp.transpose(ys, (1, 0, 2)).astype(cd).astype(f32)

    out = (jnp.sum(out * params["fc_w"][0], axis=-1) + params["fc_b"][0])
    return out.reshape(B, T)


if __name__ == "__main__":
    hidden_dim = 32   # -> hidden_dim // 3 = 10, comb_proj in = 40
    n_layers = 2
    n_test, n_questions, n_tag = 10, 20, 5
    B, T = 2, 8

    key = jax.random.PRNGKey(0)
    kp, k1, k2, k3, k4 = jax.random.split(key, 5)
    params = init_params(kp, hidden_dim, n_layers, n_test, n_questions, n_tag)

    test = jax.random.randint(k1, (B, T), 0, n_test + 1, jnp.int32)
    question = jax.random.randint(k2, (B, T), 0, n_questions + 1, jnp.int32)
    tag = jax.random.randint(k3, (B, T), 0, n_tag + 1, jnp.int32)
    interaction = jax.random.randint(k4, (B, T), 0, 3, jnp.int32)
    mask = jnp.ones((B, T), jnp.int32)  # unused in forward (matches reference)

    # 1) f32-matmul path: exact check against the PyTorch-semantics reference.
    prep_f32 = prepare_params(params, jnp.float32)
    out_f32 = forward(prep_f32, test, question, tag, mask, interaction,
                      hidden_dim=hidden_dim, time_block=8)
    out_f32 = jax.block_until_ready(out_f32)
    assert out_f32.shape == (B, T), out_f32.shape
    ref_f32 = forward_ref(params, test, question, tag, mask, interaction,
                          hidden_dim, jnp.float32)
    assert jnp.allclose(out_f32, ref_f32, atol=1e-4, rtol=1e-4), (out_f32, ref_f32)

    # 2) bf16 MXU-operand path (perf default) vs matched-precision reference.
    prep_bf16 = prepare_params(params, jnp.bfloat16)
    out_bf16 = forward(prep_bf16, test, question, tag, mask, interaction,
                       hidden_dim=hidden_dim, time_block=8)
    out_bf16 = jax.block_until_ready(out_bf16)
    ref_bf16 = forward_ref(params, test, question, tag, mask, interaction,
                           hidden_dim, jnp.bfloat16)
    assert jnp.allclose(out_bf16, ref_bf16, atol=2e-3, rtol=2e-2), (out_bf16, ref_bf16)

    print("KERNEL_OK")
</pallas_src>

<mosaic_0001>
module attributes {stable_mosaic.version = 11 : i64} {
  func.func @_linear_kernel(%arg0: i32, %arg1: memref<16x40xf32, #tpu.memory_space<vmem>>, %arg2: memref<40x32xf32, #tpu.memory_space<vmem>>, %arg3: memref<1x32xf32, #tpu.memory_space<vmem>>, %arg4: memref<16x32xf32, #tpu.memory_space<vmem>>) attributes {dimension_semantics = [#tpu.dimension_semantics<parallel>], iteration_bounds = array<i64: 1>, scalar_prefetch = 0 : i64, scratch_operands = 0 : i64, tpu.core_type = #tpu.core_type<tc>, window_params = [{transform_indices = @transform_0, window_bounds = array<i64: 16, 40>}, {pipeline_mode = #tpu.pipeline_mode<synchronous>, transform_indices = @transform_1, window_bounds = array<i64: 40, 32>}, {pipeline_mode = #tpu.pipeline_mode<synchronous>, transform_indices = @transform_2, window_bounds = array<i64: 1, 32>}, {transform_indices = @transform_3, window_bounds = array<i64: 16, 32>}]} {
    %c0 = arith.constant 0 : index
    %c0_0 = arith.constant 0 : index
    %0 = vector.load %arg1[%c0, %c0_0] : memref<16x40xf32, #tpu.memory_space<vmem>>, vector<16x40xf32>
    %c0_1 = arith.constant 0 : index
    %c0_2 = arith.constant 0 : index
    %1 = vector.load %arg2[%c0_1, %c0_2] : memref<40x32xf32, #tpu.memory_space<vmem>>, vector<40x32xf32>
    %cst = arith.constant dense<0.000000e+00> : vector<16x32xf32>
    %2 = tpu.matmul %0, %1, %cst {dimension_numbers = #tpu.dot_dimension_numbers<[1], [0], [0], [1], [0, 0, 1, 1], [], []>} : vector<16x40xf32>, vector<40x32xf32>, vector<16x32xf32> -> vector<16x32xf32>
    %c0_3 = arith.constant 0 : index
    %c0_4 = arith.constant 0 : index
    %3 = vector.load %arg3[%c0_3, %c0_4] : memref<1x32xf32, #tpu.memory_space<vmem>>, vector<1x32xf32>
    %4 = vector.broadcast %3 : vector<1x32xf32> to vector<16x32xf32>
    %5 = arith.addf %2, %4 : vector<16x32xf32>
    %c0_5 = arith.constant 0 : index
    %c0_6 = arith.constant 0 : index
    %6 = vector.load %arg4[%c0_5, %c0_6] : memref<16x32xf32, #tpu.memory_space<vmem>>, vector<16x32xf32>
    tpu.vector_store %arg4[%c0_5, %c0_6], %5 {strides = array<i32>} : memref<16x32xf32, #tpu.memory_space<vmem>>, vector<16x32xf32>,
    return
  }
  func.func @transform_0(%arg0: i32) -> (i32, i32) {
    %c0_i32 = arith.constant 0 : i32
    %c0_i32_0 = arith.constant 0 : i32
    return %arg0, %c0_i32 : i32, i32
  }
  func.func @transform_1(%arg0: i32) -> (i32, i32) {
    %c0_i32 = arith.constant 0 : i32
    %c0_i32_0 = arith.constant 0 : i32
    %c0_i32_1 = arith.constant 0 : i32
    return %c0_i32, %c0_i32_0 : i32, i32
  }
  func.func @transform_2(%arg0: i32) -> (i32, i32) {
    %c0_i32 = arith.constant 0 : i32
    %c0_i32_0 = arith.constant 0 : i32
    %c0_i32_1 = arith.constant 0 : i32
    return %c0_i32, %c0_i32_0 : i32, i32
  }
  func.func @transform_3(%arg0: i32) -> (i32, i32) {
    %c0_i32 = arith.constant 0 : i32
    %c0_i32_0 = arith.constant 0 : i32
    return %arg0, %c0_i32 : i32, i32
  }
}

module attributes {stable_mosaic.version = 11 : i64} {
  func.func @_fc_kernel(%arg0: i32, %arg1: memref<16x32xf32, #tpu.memory_space<vmem>>, %arg2: memref<1x32xf32, #tpu.memory_space<vmem>>, %arg3: memref<1x1xf32, #tpu.memory_space<vmem>>, %arg4: memref<16x1xf32, #tpu.memory_space<vmem>>) attributes {dimension_semantics = [#tpu.dimension_semantics<parallel>], iteration_bounds = array<i64: 1>, scalar_prefetch = 0 : i64, scratch_operands = 0 : i64, tpu.core_type = #tpu.core_type<tc>, window_params = [{transform_indices = @transform_0, window_bounds = array<i64: 16, 32>}, {pipeline_mode = #tpu.pipeline_mode<synchronous>, transform_indices = @transform_1, window_bounds = array<i64: 1, 32>}, {pipeline_mode = #tpu.pipeline_mode<synchronous>, transform_indices = @transform_2, window_bounds = array<i64: 1, 1>}, {transform_indices = @transform_3, window_bounds = array<i64: 16, 1>}]} {
    %c0 = arith.constant 0 : index
    %c0_0 = arith.constant 0 : index
    %0 = vector.load %arg1[%c0, %c0_0] : memref<16x32xf32, #tpu.memory_space<vmem>>, vector<16x32xf32>
    %c0_1 = arith.constant 0 : index
    %c0_2 = arith.constant 0 : index
    %1 = vector.load %arg2[%c0_1, %c0_2] : memref<1x32xf32, #tpu.memory_space<vmem>>, vector<1x32xf32>
    %2 = vector.broadcast %1 : vector<1x32xf32> to vector<16x32xf32>
    %3 = arith.mulf %0, %2 : vector<16x32xf32>
    %cst = arith.constant dense<0.000000e+00> : vector<16xf32>
    %4 = vector.multi_reduction <add>, %3, %cst [1] : vector<16x32xf32> to vector<16xf32>
    %5 = vector.shape_cast %4 : vector<16xf32> to vector<16x1xf32>
    %c0_3 = arith.constant 0 : index
    %c0_4 = arith.constant 0 : index
    %6 = vector.load %arg3[%c0_3, %c0_4] : memref<1x1xf32, #tpu.memory_space<vmem>>, vector<1x1xf32>
    %7 = vector.broadcast %6 : vector<1x1xf32> to vector<16x1xf32>
    %8 = arith.addf %5, %7 : vector<16x1xf32>
    %c0_5 = arith.constant 0 : index
    %c0_6 = arith.constant 0 : index
    %9 = vector.load %arg4[%c0_5, %c0_6] : memref<16x1xf32, #tpu.memory_space<vmem>>, vector<16x1xf32>
    tpu.vector_store %arg4[%c0_5, %c0_6], %8 {strides = array<i32>} : memref<16x1xf32, #tpu.memory_space<vmem>>, vector<16x1xf32>,
    return
  }
  func.func @transform_0(%arg0: i32) -> (i32, i32) {
    %c0_i32 = arith.constant 0 : i32
    %c0_i32_0 = arith.constant 0 : i32
    return %arg0, %c0_i32 : i32, i32
  }
  func.func @transform_1(%arg0: i32) -> (i32, i32) {
    %c0_i32 = arith.constant 0 : i32
    %c0_i32_0 = arith.constant 0 : i32
    %c0_i32_1 = arith.constant 0 : i32
    return %c0_i32, %c0_i32_0 : i32, i32
  }
  func.func @transform_2(%arg0: i32) -> (i32, i32) {
    %c0_i32 = arith.constant 0 : i32
    %c0_i32_0 = arith.constant 0 : i32
    %c0_i32_1 = arith.constant 0 : i32
    return %c0_i32, %c0_i32_0 : i32, i32
  }
  func.func @transform_3(%arg0: i32) -> (i32, i32) {
    %c0_i32 = arith.constant 0 : i32
    %c0_i32_0 = arith.constant 0 : i32
    return %arg0, %c0_i32 : i32, i32
  }
}

module attributes {stable_mosaic.version = 11 : i64} {
  func.func @_linear_kernel(%arg0: i32, %arg1: memref<64x32xf32, #tpu.memory_space<vmem>>, %arg2: memref<32x128xf32, #tpu.memory_space<vmem>>, %arg3: memref<1x128xf32, #tpu.memory_space<vmem>>, %arg4: memref<64x128xf32, #tpu.memory_space<vmem>>) attributes {dimension_semantics = [#tpu.dimension_semantics<parallel>], iteration_bounds = array<i64: 1>, scalar_prefetch = 0 : i64, scratch_operands = 0 : i64, tpu.core_type = #tpu.core_type<tc>, window_params = [{transform_indices = @transform_0, window_bounds = array<i64: 64, 32>}, {pipeline_mode = #tpu.pipeline_mode<synchronous>, transform_indices = @transform_1, window_bounds = array<i64: 32, 128>}, {pipeline_mode = #tpu.pipeline_mode<synchronous>, transform_indices = @transform_2, window_bounds = array<i64: 1, 128>}, {transform_indices = @transform_3, window_bounds = array<i64: 64, 128>}]} {
    %c0 = arith.constant 0 : index
    %c0_0 = arith.constant 0 : index
    %0 = vector.load %arg1[%c0, %c0_0] : memref<64x32xf32, #tpu.memory_space<vmem>>, vector<64x32xf32>
    %c0_1 = arith.constant 0 : index
    %c0_2 = arith.constant 0 : index
    %1 = vector.load %arg2[%c0_1, %c0_2] : memref<32x128xf32, #tpu.memory_space<vmem>>, vector<32x128xf32>
    %cst = arith.constant dense<0.000000e+00> : vector<64x128xf32>
    %2 = tpu.matmul %0, %1, %cst {dimension_numbers = #tpu.dot_dimension_numbers<[1], [0], [0], [1], [0, 0, 1, 1], [], []>} : vector<64x32xf32>, vector<32x128xf32>, vector<64x128xf32> -> vector<64x128xf32>
    %c0_3 = arith.constant 0 : index
    %c0_4 = arith.constant 0 : index
    %3 = vector.load %arg3[%c0_3, %c0_4] : memref<1x128xf32, #tpu.memory_space<vmem>>, vector<1x128xf32>
    %4 = vector.broadcast %3 : vector<1x128xf32> to vector<64x128xf32>
    %5 = arith.addf %2, %4 : vector<64x128xf32>
    %c0_5 = arith.constant 0 : index
    %c0_6 = arith.constant 0 : index
    %6 = vector.load %arg4[%c0_5, %c0_6] : memref<64x128xf32, #tpu.memory_space<vmem>>, vector<64x128xf32>
    tpu.vector_store %arg4[%c0_5, %c0_6], %5 {strides = array<i32>} : memref<64x128xf32, #tpu.memory_space<vmem>>, vector<64x128xf32>,
    return
  }
  func.func @transform_0(%arg0: i32) -> (i32, i32) {
    %c0_i32 = arith.constant 0 : i32
    %c0_i32_0 = arith.constant 0 : i32
    return %arg0, %c0_i32 : i32, i32
  }
  func.func @transform_1(%arg0: i32) -> (i32, i32) {
    %c0_i32 = arith.constant 0 : i32
    %c0_i32_0 = arith.constant 0 : i32
    %c0_i32_1 = arith.constant 0 : i32
    return %c0_i32, %c0_i32_0 : i32, i32
  }
  func.func @transform_2(%arg0: i32) -> (i32, i32) {
    %c0_i32 = arith.constant 0 : i32
    %c0_i32_0 = arith.constant 0 : i32
    %c0_i32_1 = arith.constant 0 : i32
    return %c0_i32, %c0_i32_0 : i32, i32
  }
  func.func @transform_3(%arg0: i32) -> (i32, i32) {
    %c0_i32 = arith.constant 0 : i32
    %c0_i32_0 = arith.constant 0 : i32
    return %arg0, %c0_i32 : i32, i32
  }
}

module attributes {stable_mosaic.version = 11 : i64} {
  func.func @_lstm_rec_kernel(%arg0: i32, %arg1: memref<8x8x128xf32, #tpu.memory_space<vmem>>, %arg2: memref<32x128xf32, #tpu.memory_space<any>>, %arg3: memref<8x8x32xf32, #tpu.memory_space<vmem>>, %arg4: memref<32x128xf32, #tpu.memory_space<vmem>>, %arg5: memref<8x32xf32, #tpu.memory_space<vmem>>, %arg6: memref<8x32xf32, #tpu.memory_space<vmem>>, %arg7: memref<!tpu.dma_semaphore, #tpu.memory_space<semaphore_mem>>) attributes {dimension_semantics = [#tpu.dimension_semantics<arbitrary>], iteration_bounds = array<i64: 1>, scalar_prefetch = 0 : i64, scratch_operands = 4 : i64, tpu.core_type = #tpu.core_type<tc>, window_params = [{transform_indices = @transform_0, window_bounds = array<i64: 8, 8, 128>}, {}, {transform_indices = @transform_2, window_bounds = array<i64: 8, 8, 32>}]} {
    %c0_i32 = arith.constant 0 : i32
    %0 = arith.cmpi eq, %arg0, %c0_i32 : i32
    %1 = arith.extui %0 : i1 to i32
    %c0_i32_0 = arith.constant 0 : i32
    %2 = arith.cmpi ne, %1, %c0_i32_0 : i32
    scf.if %2 {
      tpu.enqueue_dma source(%arg2 : memref<32x128xf32, #tpu.memory_space<any>>) target(%arg4 : memref<32x128xf32, #tpu.memory_space<vmem>>) target_semaphore(%arg7 : memref<!tpu.dma_semaphore, #tpu.memory_space<semaphore_mem>>)
      tpu.wait_dma2 semaphore(%arg7 : memref<!tpu.dma_semaphore, #tpu.memory_space<semaphore_mem>>) src(%arg2 : memref<32x128xf32, #tpu.memory_space<any>>) dst(%arg4 : memref<32x128xf32, #tpu.memory_space<vmem>>)
      %cst_130 = arith.constant 0.000000e+00 : f32
      %308 = vector.broadcast %cst_130 : f32 to vector<8x32xf32>
      %c0_131 = arith.constant 0 : index
      %c0_132 = arith.constant 0 : index
      %309 = vector.load %arg5[%c0_131, %c0_132] : memref<8x32xf32, #tpu.memory_space<vmem>>, vector<8x32xf32>
      tpu.vector_store %arg5[%c0_131, %c0_132], %308 {strides = array<i32>} : memref<8x32xf32, #tpu.memory_space<vmem>>, vector<8x32xf32>,
      %cst_133 = arith.constant 0.000000e+00 : f32
      %310 = vector.broadcast %cst_133 : f32 to vector<8x32xf32>
      %c0_134 = arith.constant 0 : index
      %c0_135 = arith.constant 0 : index
      %311 = vector.load %arg6[%c0_134, %c0_135] : memref<8x32xf32, #tpu.memory_space<vmem>>, vector<8x32xf32>
      tpu.vector_store %arg6[%c0_134, %c0_135], %310 {strides = array<i32>} : memref<8x32xf32, #tpu.memory_space<vmem>>, vector<8x32xf32>,
    } else {
    }
    %c0 = arith.constant 0 : index
    %c0_1 = arith.constant 0 : index
    %3 = vector.load %arg4[%c0, %c0_1] : memref<32x128xf32, #tpu.memory_space<vmem>>, vector<32x128xf32>
    %c0_i32_2 = arith.constant 0 : i32
    %4 = arith.index_cast %c0_i32_2 : i32 to index
    %c0_3 = arith.constant 0 : index
    %c0_4 = arith.constant 0 : index
    %5 = vector.load %arg1[%4, %c0_3, %c0_4] : memref<8x8x128xf32, #tpu.memory_space<vmem>>, vector<1x8x128xf32>
    %6 = vector.shape_cast %5 : vector<1x8x128xf32> to vector<8x128xf32>
    %c0_5 = arith.constant 0 : index
    %c0_6 = arith.constant 0 : index
    %7 = vector.load %arg5[%c0_5, %c0_6] : memref<8x32xf32, #tpu.memory_space<vmem>>, vector<8x32xf32>
    %cst = arith.constant dense<0.000000e+00> : vector<8x128xf32>
    %8 = tpu.matmul %7, %3, %cst {dimension_numbers = #tpu.dot_dimension_numbers<[1], [0], [0], [1], [0, 0, 1, 1], [], []>} : vector<8x32xf32>, vector<32x128xf32>, vector<8x128xf32> -> vector<8x128xf32>
    %9 = arith.addf %6, %8 : vector<8x128xf32>
    %10 = vector.extract_strided_slice %9 {offsets = [0, 0], sizes = [8, 32], strides = [1, 1]} : vector<8x128xf32> to vector<8x32xf32>
    %11 = arith.negf %10 : vector<8x32xf32>
    %12 = math.exp %11 : vector<8x32xf32>
    %cst_7 = arith.constant 1.000000e+00 : f32
    %13 = vector.broadcast %cst_7 : f32 to vector<8x32xf32>
    %14 = arith.addf %13, %12 : vector<8x32xf32>
    %15 = arith.divf %13, %14 : vector<8x32xf32>
    %16 = vector.extract_strided_slice %9 {offsets = [0, 32], sizes = [8, 32], strides = [1, 1]} : vector<8x128xf32> to vector<8x32xf32>
    %17 = arith.negf %16 : vector<8x32xf32>
    %18 = math.exp %17 : vector<8x32xf32>
    %cst_8 = arith.constant 1.000000e+00 : f32
    %19 = vector.broadcast %cst_8 : f32 to vector<8x32xf32>
    %20 = arith.addf %19, %18 : vector<8x32xf32>
    %21 = arith.divf %19, %20 : vector<8x32xf32>
    %22 = vector.extract_strided_slice %9 {offsets = [0, 64], sizes = [8, 32], strides = [1, 1]} : vector<8x128xf32> to vector<8x32xf32>
    %23 = math.tanh %22 : vector<8x32xf32>
    %24 = vector.extract_strided_slice %9 {offsets = [0, 96], sizes = [8, 32], strides = [1, 1]} : vector<8x128xf32> to vector<8x32xf32>
    %25 = arith.negf %24 : vector<8x32xf32>
    %26 = math.exp %25 : vector<8x32xf32>
    %cst_9 = arith.constant 1.000000e+00 : f32
    %27 = vector.broadcast %cst_9 : f32 to vector<8x32xf32>
    %28 = arith.addf %27, %26 : vector<8x32xf32>
    %29 = arith.divf %27, %28 : vector<8x32xf32>
    %c0_10 = arith.constant 0 : index
    %c0_11 = arith.constant 0 : index
    %30 = vector.load %arg6[%c0_10, %c0_11] : memref<8x32xf32, #tpu.memory_space<vmem>>, vector<8x32xf32>
    %31 = arith.mulf %21, %30 : vector<8x32xf32>
    %32 = arith.mulf %15, %23 : vector<8x32xf32>
    %33 = arith.addf %31, %32 : vector<8x32xf32>
    %34 = math.tanh %33 : vector<8x32xf32>
    %35 = arith.mulf %29, %34 : vector<8x32xf32>
    %c0_12 = arith.constant 0 : index
    %c0_13 = arith.constant 0 : index
    %36 = vector.load %arg6[%c0_12, %c0_13] : memref<8x32xf32, #tpu.memory_space<vmem>>, vector<8x32xf32>
    tpu.vector_store %arg6[%c0_12, %c0_13], %33 {strides = array<i32>} : memref<8x32xf32, #tpu.memory_space<vmem>>, vector<8x32xf32>,
    %c0_14 = arith.constant 0 : index
    %c0_15 = arith.constant 0 : index
    %37 = vector.load %arg5[%c0_14, %c0_15] : memref<8x32xf32, #tpu.memory_space<vmem>>, vector<8x32xf32>
    tpu.vector_store %arg5[%c0_14, %c0_15], %35 {strides = array<i32>} : memref<8x32xf32, #tpu.memory_space<vmem>>, vector<8x32xf32>,
    %38 = arith.index_cast %c0_i32_2 : i32 to index
    %c0_16 = arith.constant 0 : index
    %c0_17 = arith.constant 0 : index
    %39 = vector.load %arg3[%38, %c0_16, %c0_17] : memref<8x8x32xf32, #tpu.memory_space<vmem>>, vector<1x8x32xf32>
    %40 = vector.shape_cast %39 : vector<1x8x32xf32> to vector<8x32xf32>
    %41 = vector.shape_cast %35 : vector<8x32xf32> to vector<1x8x32xf32>
    tpu.vector_store %arg3[%38, %c0_16, %c0_17], %41 {strides = array<i32>} : memref<8x8x32xf32, #tpu.memory_space<vmem>>, vector<1x8x32xf32>,
    %c1_i32 = arith.constant 1 : i32
    %42 = arith.index_cast %c1_i32 : i32 to index
    %c0_18 = arith.constant 0 : index
    %c0_19 = arith.constant 0 : index
    %43 = vector.load %arg1[%42, %c0_18, %c0_19] : memref<8x8x128xf32, #tpu.memory_space<vmem>>, vector<1x8x128xf32>
    %44 = vector.shape_cast %43 : vector<1x8x128xf32> to vector<8x128xf32>
    %c0_20 = arith.constant 0 : index
    %c0_21 = arith.constant 0 : index
    %45 = vector.load %arg5[%c0_20, %c0_21] : memref<8x32xf32, #tpu.memory_space<vmem>>, vector<8x32xf32>
    %cst_22 = arith.constant dense<0.000000e+00> : vector<8x128xf32>
    %46 = tpu.matmul %45, %3, %cst_22 {dimension_numbers = #tpu.dot_dimension_numbers<[1], [0], [0], [1], [0, 0, 1, 1], [], []>} : vector<8x32xf32>, vector<32x128xf32>, vector<8x128xf32> -> vector<8x128xf32>
    %47 = arith.addf %44, %46 : vector<8x128xf32>
    %48 = vector.extract_strided_slice %47 {offsets = [0, 0], sizes = [8, 32], strides = [1, 1]} : vector<8x128xf32> to vector<8x32xf32>
    %49 = arith.negf %48 : vector<8x32xf32>
    %50 = math.exp %49 : vector<8x32xf32>
    %cst_23 = arith.constant 1.000000e+00 : f32
    %51 = vector.broadcast %cst_23 : f32 to vector<8x32xf32>
    %52 = arith.addf %51, %50 : vector<8x32xf32>
    %53 = arith.divf %51, %52 : vector<8x32xf32>
    %54 = vector.extract_strided_slice %47 {offsets = [0, 32], sizes = [8, 32], strides = [1, 1]} : vector<8x128xf32> to vector<8x32xf32>
    %55 = arith.negf %54 : vector<8x32xf32>
    %56 = math.exp %55 : vector<8x32xf32>
    %cst_24 = arith.constant 1.000000e+00 : f32
    %57 = vector.broadcast %cst_24 : f32 to vector<8x32xf32>
    %58 = arith.addf %57, %56 : vector<8x32xf32>
    %59 = arith.divf %57, %58 : vector<8x32xf32>
    %60 = vector.extract_strided_slice %47 {offsets = [0, 64], sizes = [8, 32], strides = [1, 1]} : vector<8x128xf32> to vector<8x32xf32>
    %61 = math.tanh %60 : vector<8x32xf32>
    %62 = vector.extract_strided_slice %47 {offsets = [0, 96], sizes = [8, 32], strides = [1, 1]} : vector<8x128xf32> to vector<8x32xf32>
    %63 = arith.negf %62 : vector<8x32xf32>
    %64 = math.exp %63 : vector<8x32xf32>
    %cst_25 = arith.constant 1.000000e+00 : f32
    %65 = vector.broadcast %cst_25 : f32 to vector<8x32xf32>
    %66 = arith.addf %65, %64 : vector<8x32xf32>
    %67 = arith.divf %65, %66 : vector<8x32xf32>
    %c0_26 = arith.constant 0 : index
    %c0_27 = arith.constant 0 : index
    %68 = vector.load %arg6[%c0_26, %c0_27] : memref<8x32xf32, #tpu.memory_space<vmem>>, vector<8x32xf32>
    %69 = arith.mulf %59, %68 : vector<8x32xf32>
    %70 = arith.mulf %53, %61 : vector<8x32xf32>
    %71 = arith.addf %69, %70 : vector<8x32xf32>
    %72 = math.tanh %71 : vector<8x32xf32>
    %73 = arith.mulf %67, %72 : vector<8x32xf32>
    %c0_28 = arith.constant 0 : index
    %c0_29 = arith.constant 0 : index
    %74 = vector.load %arg6[%c0_28, %c0_29] : memref<8x32xf32, #tpu.memory_space<vmem>>, vector<8x32xf32>
    tpu.vector_store %arg6[%c0_28, %c0_29], %71 {strides = array<i32>} : memref<8x32xf32, #tpu.memory_space<vmem>>, vector<8x32xf32>,
    %c0_30 = arith.constant 0 : index
    %c0_31 = arith.constant 0 : index
    %75 = vector.load %arg5[%c0_30, %c0_31] : memref<8x32xf32, #tpu.memory_space<vmem>>, vector<8x32xf32>
    tpu.vector_store %arg5[%c0_30, %c0_31], %73 {strides = array<i32>} : memref<8x32xf32, #tpu.memory_space<vmem>>, vector<8x32xf32>,
    %76 = arith.index_cast %c1_i32 : i32 to index
    %c0_32 = arith.constant 0 : index
    %c0_33 = arith.constant 0 : index
    %77 = vector.load %arg3[%76, %c0_32, %c0_33] : memref<8x8x32xf32, #tpu.memory_space<vmem>>, vector<1x8x32xf32>
    %78 = vector.shape_cast %77 : vector<1x8x32xf32> to vector<8x32xf32>
    %79 = vector.shape_cast %73 : vector<8x32xf32> to vector<1x8x32xf32>
    tpu.vector_store %arg3[%76, %c0_32, %c0_33], %79 {strides = array<i32>} : memref<8x8x32xf32, #tpu.memory_space<vmem>>, vector<1x8x32xf32>,
    %c2_i32 = arith.constant 2 : i32
    %80 = arith.index_cast %c2_i32 : i32 to index
    %c0_34 = arith.constant 0 : index
    %c0_35 = arith.constant 0 : index
    %81 = vector.load %arg1[%80, %c0_34, %c0_35] : memref<8x8x128xf32, #tpu.memory_space<vmem>>, vector<1x8x128xf32>
    %82 = vector.shape_cast %81 : vector<1x8x128xf32> to vector<8x128xf32>
    %c0_36 = arith.constant 0 : index
    %c0_37 = arith.constant 0 : index
    %83 = vector.load %arg5[%c0_36, %c0_37] : memref<8x32xf32, #tpu.memory_space<vmem>>, vector<8x32xf32>
    %cst_38 = arith.constant dense<0.000000e+00> : vector<8x128xf32>
    %84 = tpu.matmul %83, %3, %cst_38 {dimension_numbers = #tpu.dot_dimension_numbers<[1], [0], [0], [1], [0, 0, 1, 1], [], []>} : vector<8x32xf32>, vector<32x128xf32>, vector<8x128xf32> -> vector<8x128xf32>
    %85 = arith.addf %82, %84 : vector<8x128xf32>
    %86 = vector.extract_strided_slice %85 {offsets = [0, 0], sizes = [8, 32], strides = [1, 1]} : vector<8x128xf32> to vector<8x32xf32>
    %87 = arith.negf %86 : vector<8x32xf32>
    %88 = math.exp %87 : vector<8x32xf32>
    %cst_39 = arith.constant 1.000000e+00 : f32
    %89 = vector.broadcast %cst_39 : f32 to vector<8x32xf32>
    %90 = arith.addf %89, %88 : vector<8x32xf32>
    %91 = arith.divf %89, %90 : vector<8x32xf32>
    %92 = vector.extract_strided_slice %85 {offsets = [0, 32], sizes = [8, 32], strides = [1, 1]} : vector<8x128xf32> to vector<8x32xf32>
    %93 = arith.negf %92 : vector<8x32xf32>
    %94 = math.exp %93 : vector<8x32xf32>
    %cst_40 = arith.constant 1.000000e+00 : f32
    %95 = vector.broadcast %cst_40 : f32 to vector<8x32xf32>
    %96 = arith.addf %95, %94 : vector<8x32xf32>
    %97 = arith.divf %95, %96 : vector<8x32xf32>
    %98 = vector.extract_strided_slice %85 {offsets = [0, 64], sizes = [8, 32], strides = [1, 1]} : vector<8x128xf32> to vector<8x32xf32>
    %99 = math.tanh %98 : vector<8x32xf32>
    %100 = vector.extract_strided_slice %85 {offsets = [0, 96], sizes = [8, 32], strides = [1, 1]} : vector<8x128xf32> to vector<8x32xf32>
    %101 = arith.negf %100 : vector<8x32xf32>
    %102 = math.exp %101 : vector<8x32xf32>
    %cst_41 = arith.constant 1.000000e+00 : f32
    %103 = vector.broadcast %cst_41 : f32 to vector<8x32xf32>
    %104 = arith.addf %103, %102 : vector<8x32xf32>
    %105 = arith.divf %103, %104 : vector<8x32xf32>
    %c0_42 = arith.constant 0 : index
    %c0_43 = arith.constant 0 : index
    %106 = vector.load %arg6[%c0_42, %c0_43] : memref<8x32xf32, #tpu.memory_space<vmem>>, vector<8x32xf32>
    %107 = arith.mulf %97, %106 : vector<8x32xf32>
    %108 = arith.mulf %91, %99 : vector<8x32xf32>
    %109 = arith.addf %107, %108 : vector<8x32xf32>
    %110 = math.tanh %109 : vector<8x32xf32>
    %111 = arith.mulf %105, %110 : vector<8x32xf32>
    %c0_44 = arith.constant 0 : index
    %c0_45 = arith.constant 0 : index
    %112 = vector.load %arg6[%c0_44, %c0_45] : memref<8x32xf32, #tpu.memory_space<vmem>>, vector<8x32xf32>
    tpu.vector_store %arg6[%c0_44, %c0_45], %109 {strides = array<i32>} : memref<8x32xf32, #tpu.memory_space<vmem>>, vector<8x32xf32>,
    %c0_46 = arith.constant 0 : index
    %c0_47 = arith.constant 0 : index
    %113 = vector.load %arg5[%c0_46, %c0_47] : memref<8x32xf32, #tpu.memory_space<vmem>>, vector<8x32xf32>
    tpu.vector_store %arg5[%c0_46, %c0_47], %111 {strides = array<i32>} : memref<8x32xf32, #tpu.memory_space<vmem>>, vector<8x32xf32>,
    %114 = arith.index_cast %c2_i32 : i32 to index
    %c0_48 = arith.constant 0 : index
    %c0_49 = arith.constant 0 : index
    %115 = vector.load %arg3[%114, %c0_48, %c0_49] : memref<8x8x32xf32, #tpu.memory_space<vmem>>, vector<1x8x32xf32>
    %116 = vector.shape_cast %115 : vector<1x8x32xf32> to vector<8x32xf32>
    %117 = vector.shape_cast %111 : vector<8x32xf32> to vector<1x8x32xf32>
    tpu.vector_store %arg3[%114, %c0_48, %c0_49], %117 {strides = array<i32>} : memref<8x8x32xf32, #tpu.memory_space<vmem>>, vector<1x8x32xf32>,
    %c3_i32 = arith.constant 3 : i32
    %118 = arith.index_cast %c3_i32 : i32 to index
    %c0_50 = arith.constant 0 : index
    %c0_51 = arith.constant 0 : index
    %119 = vector.load %arg1[%118, %c0_50, %c0_51] : memref<8x8x128xf32, #tpu.memory_space<vmem>>, vector<1x8x128xf32>
    %120 = vector.shape_cast %119 : vector<1x8x128xf32> to vector<8x128xf32>
    %c0_52 = arith.constant 0 : index
    %c0_53 = arith.constant 0 : index
    %121 = vector.load %arg5[%c0_52, %c0_53] : memref<8x32xf32, #tpu.memory_space<vmem>>, vector<8x32xf32>
    %cst_54 = arith.constant dense<0.000000e+00> : vector<8x128xf32>
    %122 = tpu.matmul %121, %3, %cst_54 {dimension_numbers = #tpu.dot_dimension_numbers<[1], [0], [0], [1], [0, 0, 1, 1], [], []>} : vector<8x32xf32>, vector<32x128xf32>, vector<8x128xf32> -> vector<8x128xf32>
    %123 = arith.addf %120, %122 : vector<8x128xf32>
    %124 = vector.extract_strided_slice %123 {offsets = [0, 0], sizes = [8, 32], strides = [1, 1]} : vector<8x128xf32> to vector<8x32xf32>
    %125 = arith.negf %124 : vector<8x32xf32>
    %126 = math.exp %125 : vector<8x32xf32>
    %cst_55 = arith.constant 1.000000e+00 : f32
    %127 = vector.broadcast %cst_55 : f32 to vector<8x32xf32>
    %128 = arith.addf %127, %126 : vector<8x32xf32>
    %129 = arith.divf %127, %128 : vector<8x32xf32>
    %130 = vector.extract_strided_slice %123 {offsets = [0, 32], sizes = [8, 32], strides = [1, 1]} : vector<8x128xf32> to vector<8x32xf32>
    %131 = arith.negf %130 : vector<8x32xf32>
    %132 = math.exp %131 : vector<8x32xf32>
    %cst_56 = arith.constant 1.000000e+00 : f32
    %133 = vector.broadcast %cst_56 : f32 to vector<8x32xf32>
    %134 = arith.addf %133, %132 : vector<8x32xf32>
    %135 = arith.divf %133, %134 : vector<8x32xf32>
    %136 = vector.extract_strided_slice %123 {offsets = [0, 64], sizes = [8, 32], strides = [1, 1]} : vector<8x128xf32> to vector<8x32xf32>
    %137 = math.tanh %136 : vector<8x32xf32>
    %138 = vector.extract_strided_slice %123 {offsets = [0, 96], sizes = [8, 32], strides = [1, 1]} : vector<8x128xf32> to vector<8x32xf32>
    %139 = arith.negf %138 : vector<8x32xf32>
    %140 = math.exp %139 : vector<8x32xf32>
    %cst_57 = arith.constant 1.000000e+00 : f32
    %141 = vector.broadcast %cst_57 : f32 to vector<8x32xf32>
    %142 = arith.addf %141, %140 : vector<8x32xf32>
    %143 = arith.divf %141, %142 : vector<8x32xf32>
    %c0_58 = arith.constant 0 : index
    %c0_59 = arith.constant 0 : index
    %144 = vector.load %arg6[%c0_58, %c0_59] : memref<8x32xf32, #tpu.memory_space<vmem>>, vector<8x32xf32>
    %145 = arith.mulf %135, %144 : vector<8x32xf32>
    %146 = arith.mulf %129, %137 : vector<8x32xf32>
    %147 = arith.addf %145, %146 : vector<8x32xf32>
    %148 = math.tanh %147 : vector<8x32xf32>
    %149 = arith.mulf %143, %148 : vector<8x32xf32>
    %c0_60 = arith.constant 0 : index
    %c0_61 = arith.constant 0 : index
    %150 = vector.load %arg6[%c0_60, %c0_61] : memref<8x32xf32, #tpu.memory_space<vmem>>, vector<8x32xf32>
    tpu.vector_store %arg6[%c0_60, %c0_61], %147 {strides = array<i32>} : memref<8x32xf32, #tpu.memory_space<vmem>>, vector<8x32xf32>,
    %c0_62 = arith.constant 0 : index
    %c0_63 = arith.constant 0 : index
    %151 = vector.load %arg5[%c0_62, %c0_63] : memref<8x32xf32, #tpu.memory_space<vmem>>, vector<8x32xf32>
    tpu.vector_store %arg5[%c0_62, %c0_63], %149 {strides = array<i32>} : memref<8x32xf32, #tpu.memory_space<vmem>>, vector<8x32xf32>,
    %152 = arith.index_cast %c3_i32 : i32 to index
    %c0_64 = arith.constant 0 : index
    %c0_65 = arith.constant 0 : index
    %153 = vector.load %arg3[%152, %c0_64, %c0_65] : memref<8x8x32xf32, #tpu.memory_space<vmem>>, vector<1x8x32xf32>
    %154 = vector.shape_cast %153 : vector<1x8x32xf32> to vector<8x32xf32>
    %155 = vector.shape_cast %149 : vector<8x32xf32> to vector<1x8x32xf32>
    tpu.vector_store %arg3[%152, %c0_64, %c0_65], %155 {strides = array<i32>} : memref<8x8x32xf32, #tpu.memory_space<vmem>>, vector<1x8x32xf32>,
    %c4_i32 = arith.constant 4 : i32
    %156 = arith.index_cast %c4_i32 : i32 to index
    %c0_66 = arith.constant 0 : index
    %c0_67 = arith.constant 0 : index
    %157 = vector.load %arg1[%156, %c0_66, %c0_67] : memref<8x8x128xf32, #tpu.memory_space<vmem>>, vector<1x8x128xf32>
    %158 = vector.shape_cast %157 : vector<1x8x128xf32> to vector<8x128xf32>
    %c0_68 = arith.constant 0 : index
    %c0_69 = arith.constant 0 : index
    %159 = vector.load %arg5[%c0_68, %c0_69] : memref<8x32xf32, #tpu.memory_space<vmem>>, vector<8x32xf32>
    %cst_70 = arith.constant dense<0.000000e+00> : vector<8x128xf32>
    %160 = tpu.matmul %159, %3, %cst_70 {dimension_numbers = #tpu.dot_dimension_numbers<[1], [0], [0], [1], [0, 0, 1, 1], [], []>} : vector<8x32xf32>, vector<32x128xf32>, vector<8x128xf32> -> vector<8x128xf32>
    %161 = arith.addf %158, %160 : vector<8x128xf32>
    %162 = vector.extract_strided_slice %161 {offsets = [0, 0], sizes = [8, 32], strides = [1, 1]} : vector<8x128xf32> to vector<8x32xf32>
    %163 = arith.negf %162 : vector<8x32xf32>
    %164 = math.exp %163 : vector<8x32xf32>
    %cst_71 = arith.constant 1.000000e+00 : f32
    %165 = vector.broadcast %cst_71 : f32 to vector<8x32xf32>
    %166 = arith.addf %165, %164 : vector<8x32xf32>
    %167 = arith.divf %165, %166 : vector<8x32xf32>
    %168 = vector.extract_strided_slice %161 {offsets = [0, 32], sizes = [8, 32], strides = [1, 1]} : vector<8x128xf32> to vector<8x32xf32>
    %169 = arith.negf %168 : vector<8x32xf32>
    %170 = math.exp %169 : vector<8x32xf32>
    %cst_72 = arith.constant 1.000000e+00 : f32
    %171 = vector.broadcast %cst_72 : f32 to vector<8x32xf32>
    %172 = arith.addf %171, %170 : vector<8x32xf32>
    %173 = arith.divf %171, %172 : vector<8x32xf32>
    %174 = vector.extract_strided_slice %161 {offsets = [0, 64], sizes = [8, 32], strides = [1, 1]} : vector<8x128xf32> to vector<8x32xf32>
    %175 = math.tanh %174 : vector<8x32xf32>
    %176 = vector.extract_strided_slice %161 {offsets = [0, 96], sizes = [8, 32], strides = [1, 1]} : vector<8x128xf32> to vector<8x32xf32>
    %177 = arith.negf %176 : vector<8x32xf32>
    %178 = math.exp %177 : vector<8x32xf32>
    %cst_73 = arith.constant 1.000000e+00 : f32
    %179 = vector.broadcast %cst_73 : f32 to vector<8x32xf32>
    %180 = arith.addf %179, %178 : vector<8x32xf32>
    %181 = arith.divf %179, %180 : vector<8x32xf32>
    %c0_74 = arith.constant 0 : index
    %c0_75 = arith.constant 0 : index
    %182 = vector.load %arg6[%c0_74, %c0_75] : memref<8x32xf32, #tpu.memory_space<vmem>>, vector<8x32xf32>
    %183 = arith.mulf %173, %182 : vector<8x32xf32>
    %184 = arith.mulf %167, %175 : vector<8x32xf32>
    %185 = arith.addf %183, %184 : vector<8x32xf32>
    %186 = math.tanh %185 : vector<8x32xf32>
    %187 = arith.mulf %181, %186 : vector<8x32xf32>
    %c0_76 = arith.constant 0 : index
    %c0_77 = arith.constant 0 : index
    %188 = vector.load %arg6[%c0_76, %c0_77] : memref<8x32xf32, #tpu.memory_space<vmem>>, vector<8x32xf32>
    tpu.vector_store %arg6[%c0_76, %c0_77], %185 {strides = array<i32>} : memref<8x32xf32, #tpu.memory_space<vmem>>, vector<8x32xf32>,
    %c0_78 = arith.constant 0 : index
    %c0_79 = arith.constant 0 : index
    %189 = vector.load %arg5[%c0_78, %c0_79] : memref<8x32xf32, #tpu.memory_space<vmem>>, vector<8x32xf32>
    tpu.vector_store %arg5[%c0_78, %c0_79], %187 {strides = array<i32>} : memref<8x32xf32, #tpu.memory_space<vmem>>, vector<8x32xf32>,
    %190 = arith.index_cast %c4_i32 : i32 to index
    %c0_80 = arith.constant 0 : index
    %c0_81 = arith.constant 0 : index
    %191 = vector.load %arg3[%190, %c0_80, %c0_81] : memref<8x8x32xf32, #tpu.memory_space<vmem>>, vector<1x8x32xf32>
    %192 = vector.shape_cast %191 : vector<1x8x32xf32> to vector<8x32xf32>
    %193 = vector.shape_cast %187 : vector<8x32xf32> to vector<1x8x32xf32>
    tpu.vector_store %arg3[%190, %c0_80, %c0_81], %193 {strides = array<i32>} : memref<8x8x32xf32, #tpu.memory_space<vmem>>, vector<1x8x32xf32>,
    %c5_i32 = arith.constant 5 : i32
    %194 = arith.index_cast %c5_i32 : i32 to index
    %c0_82 = arith.constant 0 : index
    %c0_83 = arith.constant 0 : index
    %195 = vector.load %arg1[%194, %c0_82, %c0_83] : memref<8x8x128xf32, #tpu.memory_space<vmem>>, vector<1x8x128xf32>
    %196 = vector.shape_cast %195 : vector<1x8x128xf32> to vector<8x128xf32>
    %c0_84 = arith.constant 0 : index
    %c0_85 = arith.constant 0 : index
    %197 = vector.load %arg5[%c0_84, %c0_85] : memref<8x32xf32, #tpu.memory_space<vmem>>, vector<8x32xf32>
    %cst_86 = arith.constant dense<0.000000e+00> : vector<8x128xf32>
    %198 = tpu.matmul %197, %3, %cst_86 {dimension_numbers = #tpu.dot_dimension_numbers<[1], [0], [0], [1], [0, 0, 1, 1], [], []>} : vector<8x32xf32>, vector<32x128xf32>, vector<8x128xf32> -> vector<8x128xf32>
    %199 = arith.addf %196, %198 : vector<8x128xf32>
    %200 = vector.extract_strided_slice %199 {offsets = [0, 0], sizes = [8, 32], strides = [1, 1]} : vector<8x128xf32> to vector<8x32xf32>
    %201 = arith.negf %200 : vector<8x32xf32>
    %202 = math.exp %201 : vector<8x32xf32>
    %cst_87 = arith.constant 1.000000e+00 : f32
    %203 = vector.broadcast %cst_87 : f32 to vector<8x32xf32>
    %204 = arith.addf %203, %202 : vector<8x32xf32>
    %205 = arith.divf %203, %204 : vector<8x32xf32>
    %206 = vector.extract_strided_slice %199 {offsets = [0, 32], sizes = [8, 32], strides = [1, 1]} : vector<8x128xf32> to vector<8x32xf32>
    %207 = arith.negf %206 : vector<8x32xf32>
    %208 = math.exp %207 : vector<8x32xf32>
    %cst_88 = arith.constant 1.000000e+00 : f32
    %209 = vector.broadcast %cst_88 : f32 to vector<8x32xf32>
    %210 = arith.addf %209, %208 : vector<8x32xf32>
    %211 = arith.divf %209, %210 : vector<8x32xf32>
    %212 = vector.extract_strided_slice %199 {offsets = [0, 64], sizes = [8, 32], strides = [1, 1]} : vector<8x128xf32> to vector<8x32xf32>
    %213 = math.tanh %212 : vector<8x32xf32>
    %214 = vector.extract_strided_slice %199 {offsets = [0, 96], sizes = [8, 32], strides = [1, 1]} : vector<8x128xf32> to vector<8x32xf32>
    %215 = arith.negf %214 : vector<8x32xf32>
    %216 = math.exp %215 : vector<8x32xf32>
    %cst_89 = arith.constant 1.000000e+00 : f32
    %217 = vector.broadcast %cst_89 : f32 to vector<8x32xf32>
    %218 = arith.addf %217, %216 : vector<8x32xf32>
    %219 = arith.divf %217, %218 : vector<8x32xf32>
    %c0_90 = arith.constant 0 : index
    %c0_91 = arith.constant 0 : index
    %220 = vector.load %arg6[%c0_90, %c0_91] : memref<8x32xf32, #tpu.memory_space<vmem>>, vector<8x32xf32>
    %221 = arith.mulf %211, %220 : vector<8x32xf32>
    %222 = arith.mulf %205, %213 : vector<8x32xf32>
    %223 = arith.addf %221, %222 : vector<8x32xf32>
    %224 = math.tanh %223 : vector<8x32xf32>
    %225 = arith.mulf %219, %224 : vector<8x32xf32>
    %c0_92 = arith.constant 0 : index
    %c0_93 = arith.constant 0 : index
    %226 = vector.load %arg6[%c0_92, %c0_93] : memref<8x32xf32, #tpu.memory_space<vmem>>, vector<8x32xf32>
    tpu.vector_store %arg6[%c0_92, %c0_93], %223 {strides = array<i32>} : memref<8x32xf32, #tpu.memory_space<vmem>>, vector<8x32xf32>,
    %c0_94 = arith.constant 0 : index
    %c0_95 = arith.constant 0 : index
    %227 = vector.load %arg5[%c0_94, %c0_95] : memref<8x32xf32, #tpu.memory_space<vmem>>, vector<8x32xf32>
    tpu.vector_store %arg5[%c0_94, %c0_95], %225 {strides = array<i32>} : memref<8x32xf32, #tpu.memory_space<vmem>>, vector<8x32xf32>,
    %228 = arith.index_cast %c5_i32 : i32 to index
    %c0_96 = arith.constant 0 : index
    %c0_97 = arith.constant 0 : index
    %229 = vector.load %arg3[%228, %c0_96, %c0_97] : memref<8x8x32xf32, #tpu.memory_space<vmem>>, vector<1x8x32xf32>
    %230 = vector.shape_cast %229 : vector<1x8x32xf32> to vector<8x32xf32>
    %231 = vector.shape_cast %225 : vector<8x32xf32> to vector<1x8x32xf32>
    tpu.vector_store %arg3[%228, %c0_96, %c0_97], %231 {strides = array<i32>} : memref<8x8x32xf32, #tpu.memory_space<vmem>>, vector<1x8x32xf32>,
    %c6_i32 = arith.constant 6 : i32
    %232 = arith.index_cast %c6_i32 : i32 to index
    %c0_98 = arith.constant 0 : index
    %c0_99 = arith.constant 0 : index
    %233 = vector.load %arg1[%232, %c0_98, %c0_99] : memref<8x8x128xf32, #tpu.memory_space<vmem>>, vector<1x8x128xf32>
    %234 = vector.shape_cast %233 : vector<1x8x128xf32> to vector<8x128xf32>
    %c0_100 = arith.constant 0 : index
    %c0_101 = arith.constant 0 : index
    %235 = vector.load %arg5[%c0_100, %c0_101] : memref<8x32xf32, #tpu.memory_space<vmem>>, vector<8x32xf32>
    %cst_102 = arith.constant dense<0.000000e+00> : vector<8x128xf32>
    %236 = tpu.matmul %235, %3, %cst_102 {dimension_numbers = #tpu.dot_dimension_numbers<[1], [0], [0], [1], [0, 0, 1, 1], [], []>} : vector<8x32xf32>, vector<32x128xf32>, vector<8x128xf32> -> vector<8x128xf32>
    %237 = arith.addf %234, %236 : vector<8x128xf32>
    %238 = vector.extract_strided_slice %237 {offsets = [0, 0], sizes = [8, 32], strides = [1, 1]} : vector<8x128xf32> to vector<8x32xf32>
    %239 = arith.negf %238 : vector<8x32xf32>
    %240 = math.exp %239 : vector<8x32xf32>
    %cst_103 = arith.constant 1.000000e+00 : f32
    %241 = vector.broadcast %cst_103 : f32 to vector<8x32xf32>
    %242 = arith.addf %241, %240 : vector<8x32xf32>
    %243 = arith.divf %241, %242 : vector<8x32xf32>
    %244 = vector.extract_strided_slice %237 {offsets = [0, 32], sizes = [8, 32], strides = [1, 1]} : vector<8x128xf32> to vector<8x32xf32>
    %245 = arith.negf %244 : vector<8x32xf32>
    %246 = math.exp %245 : vector<8x32xf32>
    %cst_104 = arith.constant 1.000000e+00 : f32
    %247 = vector.broadcast %cst_104 : f32 to vector<8x32xf32>
    %248 = arith.addf %247, %246 : vector<8x32xf32>
    %249 = arith.divf %247, %248 : vector<8x32xf32>
    %250 = vector.extract_strided_slice %237 {offsets = [0, 64], sizes = [8, 32], strides = [1, 1]} : vector<8x128xf32> to vector<8x32xf32>
    %251 = math.tanh %250 : vector<8x32xf32>
    %252 = vector.extract_strided_slice %237 {offsets = [0, 96], sizes = [8, 32], strides = [1, 1]} : vector<8x128xf32> to vector<8x32xf32>
    %253 = arith.negf %252 : vector<8x32xf32>
    %254 = math.exp %253 : vector<8x32xf32>
    %cst_105 = arith.constant 1.000000e+00 : f32
    %255 = vector.broadcast %cst_105 : f32 to vector<8x32xf32>
    %256 = arith.addf %255, %254 : vector<8x32xf32>
    %257 = arith.divf %255, %256 : vector<8x32xf32>
    %c0_106 = arith.constant 0 : index
    %c0_107 = arith.constant 0 : index
    %258 = vector.load %arg6[%c0_106, %c0_107] : memref<8x32xf32, #tpu.memory_space<vmem>>, vector<8x32xf32>
    %259 = arith.mulf %249, %258 : vector<8x32xf32>
    %260 = arith.mulf %243, %251 : vector<8x32xf32>
    %261 = arith.addf %259, %260 : vector<8x32xf32>
    %262 = math.tanh %261 : vector<8x32xf32>
    %263 = arith.mulf %257, %262 : vector<8x32xf32>
    %c0_108 = arith.constant 0 : index
    %c0_109 = arith.constant 0 : index
    %264 = vector.load %arg6[%c0_108, %c0_109] : memref<8x32xf32, #tpu.memory_space<vmem>>, vector<8x32xf32>
    tpu.vector_store %arg6[%c0_108, %c0_109], %261 {strides = array<i32>} : memref<8x32xf32, #tpu.memory_space<vmem>>, vector<8x32xf32>,
    %c0_110 = arith.constant 0 : index
    %c0_111 = arith.constant 0 : index
    %265 = vector.load %arg5[%c0_110, %c0_111] : memref<8x32xf32, #tpu.memory_space<vmem>>, vector<8x32xf32>
    tpu.vector_store %arg5[%c0_110, %c0_111], %263 {strides = array<i32>} : memref<8x32xf32, #tpu.memory_space<vmem>>, vector<8x32xf32>,
    %266 = arith.index_cast %c6_i32 : i32 to index
    %c0_112 = arith.constant 0 : index
    %c0_113 = arith.constant 0 : index
    %267 = vector.load %arg3[%266, %c0_112, %c0_113] : memref<8x8x32xf32, #tpu.memory_space<vmem>>, vector<1x8x32xf32>
    %268 = vector.shape_cast %267 : vector<1x8x32xf32> to vector<8x32xf32>
    %269 = vector.shape_cast %263 : vector<8x32xf32> to vector<1x8x32xf32>
    tpu.vector_store %arg3[%266, %c0_112, %c0_113], %269 {strides = array<i32>} : memref<8x8x32xf32, #tpu.memory_space<vmem>>, vector<1x8x32xf32>,
    %c7_i32 = arith.constant 7 : i32
    %270 = arith.index_cast %c7_i32 : i32 to index
    %c0_114 = arith.constant 0 : index
    %c0_115 = arith.constant 0 : index
    %271 = vector.load %arg1[%270, %c0_114, %c0_115] : memref<8x8x128xf32, #tpu.memory_space<vmem>>, vector<1x8x128xf32>
    %272 = vector.shape_cast %271 : vector<1x8x128xf32> to vector<8x128xf32>
    %c0_116 = arith.constant 0 : index
    %c0_117 = arith.constant 0 : index
    %273 = vector.load %arg5[%c0_116, %c0_117] : memref<8x32xf32, #tpu.memory_space<vmem>>, vector<8x32xf32>
    %cst_118 = arith.constant dense<0.000000e+00> : vector<8x128xf32>
    %274 = tpu.matmul %273, %3, %cst_118 {dimension_numbers = #tpu.dot_dimension_numbers<[1], [0], [0], [1], [0, 0, 1, 1], [], []>} : vector<8x32xf32>, vector<32x128xf32>, vector<8x128xf32> -> vector<8x128xf32>
    %275 = arith.addf %272, %274 : vector<8x128xf32>
    %276 = vector.extract_strided_slice %275 {offsets = [0, 0], sizes = [8, 32], strides = [1, 1]} : vector<8x128xf32> to vector<8x32xf32>
    %277 = arith.negf %276 : vector<8x32xf32>
    %278 = math.exp %277 : vector<8x32xf32>
    %cst_119 = arith.constant 1.000000e+00 : f32
    %279 = vector.broadcast %cst_119 : f32 to vector<8x32xf32>
    %280 = arith.addf %279, %278 : vector<8x32xf32>
    %281 = arith.divf %279, %280 : vector<8x32xf32>
    %282 = vector.extract_strided_slice %275 {offsets = [0, 32], sizes = [8, 32], strides = [1, 1]} : vector<8x128xf32> to vector<8x32xf32>
    %283 = arith.negf %282 : vector<8x32xf32>
    %284 = math.exp %283 : vector<8x32xf32>
    %cst_120 = arith.constant 1.000000e+00 : f32
    %285 = vector.broadcast %cst_120 : f32 to vector<8x32xf32>
    %286 = arith.addf %285, %284 : vector<8x32xf32>
    %287 = arith.divf %285, %286 : vector<8x32xf32>
    %288 = vector.extract_strided_slice %275 {offsets = [0, 64], sizes = [8, 32], strides = [1, 1]} : vector<8x128xf32> to vector<8x32xf32>
    %289 = math.tanh %288 : vector<8x32xf32>
    %290 = vector.extract_strided_slice %275 {offsets = [0, 96], sizes = [8, 32], strides = [1, 1]} : vector<8x128xf32> to vector<8x32xf32>
    %291 = arith.negf %290 : vector<8x32xf32>
    %292 = math.exp %291 : vector<8x32xf32>
    %cst_121 = arith.constant 1.000000e+00 : f32
    %293 = vector.broadcast %cst_121 : f32 to vector<8x32xf32>
    %294 = arith.addf %293, %292 : vector<8x32xf32>
    %295 = arith.divf %293, %294 : vector<8x32xf32>
    %c0_122 = arith.constant 0 : index
    %c0_123 = arith.constant 0 : index
    %296 = vector.load %arg6[%c0_122, %c0_123] : memref<8x32xf32, #tpu.memory_space<vmem>>, vector<8x32xf32>
    %297 = arith.mulf %287, %296 : vector<8x32xf32>
    %298 = arith.mulf %281, %289 : vector<8x32xf32>
    %299 = arith.addf %297, %298 : vector<8x32xf32>
    %300 = math.tanh %299 : vector<8x32xf32>
    %301 = arith.mulf %295, %300 : vector<8x32xf32>
    %c0_124 = arith.constant 0 : index
    %c0_125 = arith.constant 0 : index
    %302 = vector.load %arg6[%c0_124, %c0_125] : memref<8x32xf32, #tpu.memory_space<vmem>>, vector<8x32xf32>
    tpu.vector_store %arg6[%c0_124, %c0_125], %299 {strides = array<i32>} : memref<8x32xf32, #tpu.memory_space<vmem>>, vector<8x32xf32>,
    %c0_126 = arith.constant 0 : index
    %c0_127 = arith.constant 0 : index
    %303 = vector.load %arg5[%c0_126, %c0_127] : memref<8x32xf32, #tpu.memory_space<vmem>>, vector<8x32xf32>
    tpu.vector_store %arg5[%c0_126, %c0_127], %301 {strides = array<i32>} : memref<8x32xf32, #tpu.memory_space<vmem>>, vector<8x32xf32>,
    %304 = arith.index_cast %c7_i32 : i32 to index
    %c0_128 = arith.constant 0 : index
    %c0_129 = arith.constant 0 : index
    %305 = vector.load %arg3[%304, %c0_128, %c0_129] : memref<8x8x32xf32, #tpu.memory_space<vmem>>, vector<1x8x32xf32>
    %306 = vector.shape_cast %305 : vector<1x8x32xf32> to vector<8x32xf32>
    %307 = vector.shape_cast %301 : vector<8x32xf32> to vector<1x8x32xf32>
    tpu.vector_store %arg3[%304, %c0_128, %c0_129], %307 {strides = array<i32>} : memref<8x8x32xf32, #tpu.memory_space<vmem>>, vector<1x8x32xf32>,
    %c8_i32 = arith.constant 8 : i32
    return
  }
  func.func @transform_0(%arg0: i32) -> (i32, i32, i32) {
    %c0_i32 = arith.constant 0 : i32
    %c0_i32_0 = arith.constant 0 : i32
    %c0_i32_1 = arith.constant 0 : i32
    return %arg0, %c0_i32, %c0_i32_0 : i32, i32, i32
  }
  func.func @transform_2(%arg0: i32) -> (i32, i32, i32) {
    %c0_i32 = arith.constant 0 : i32
    %c0_i32_0 = arith.constant 0 : i32
    %c0_i32_1 = arith.constant 0 : i32
    return %arg0, %c0_i32, %c0_i32_0 : i32, i32, i32
  }
}

</mosaic_0001>

<llo_original>
// kernel: forward.11
$region0: #{forward.11}
  #allocation0 [shape = 'u32[]', space=smem, size = 0x4, offset = 0x4, fixed_abs, tag = 'smem constant byte address 0x4 - core index']
  #allocation1 [shape = 'u32[144,128]{1,0:T(1,128)}', space=vmem, size = 0x12000, scoped, tag = 'internal scratch']
  #allocation2 [shape = 'f32[1,1]{1,0:T(1,128)S(1)}', space=vmem, size = 0x200, scoped, tag = 'scoped memory for forward.11']
  %s0 = inlined_call_operand.vmem [shape: f32[16,32], index: 0, kind: input, shape index: {}]
  %s1 = inlined_call_operand.vmem [shape: f32[1,32], index: 1, kind: input, shape index: {}]
  %s2 = inlined_call_operand.<no memory space> [shape: f32[1,1], index: 2, kind: input, shape index: {}]
  %s3 = inlined_call_operand.vmem [shape: f32[16,1], index: 3, kind: output, shape index: {}]
  %s4 = sld [smem:[#allocation0]]
  $region22: #{forward.11} parent=0
    _
  %s6 = ssub.s32 1, %s4
  %s7 = scalar_select 0, %s6, %s4
  %v8 = vstv %s2
  %9 = vst [vmem:[#allocation2] sm:$0x1] %v8
  // Predicated region
  $region2: #{forward.11} parent=0 // pred_check
    _
  $region3: #{forward.11} parent=0 // pred_check_branch
    %11 = sbr.rel (0) target = $region5
  $region4: #{forward.11} parent=0 // pred_region
    _
  $region5: #{forward.11} parent=0 // pred_fallthru
    _
  // Predicated region
  $region6: #{forward.11} parent=0 // pred_check
    _
  $region7: #{forward.11} parent=0 // pred_check_branch
    %13 = sbr.rel (0) target = $region9
  $region8: #{forward.11} parent=0 // pred_region
    _
  $region9: #{forward.11} parent=0 // pred_fallthru
    _
  // Predicated region
  $region10: #{forward.11} parent=0 // pred_check
    _
  $region11: #{forward.11} parent=0 // pred_check_branch
    %15 = sbr.rel (0) target = $region13
  $region12: #{forward.11} parent=0 // pred_region
    _
  $region13: #{forward.11} parent=0 // pred_fallthru
    _
  %v16 = vld [vmem:[%s0] sm:$0xff]
  %v17 = vld [vmem:[%s0 + $0x8] sm:$0xff]
  %v18 = vld [vmem:[%s1] sm:$0x1]
  %v20 = vlaneseq
  %v21 = vshrl.u32 %v20, 7
  %v22 = vsub.s32 0, %v21
  %v23 = vrot.slane %v18, %v22
  %v25 = vmul.f32 %v16, %v23
  %v26 = vmul.f32 %v17, %v23
  %vm27 = vcmask 261120
  %v28 = vsel %vm27, %v25, 0.0
  %29 = vadd.xlane.f32.xlu0 %v28
  %v30 = vpop.xlane.xlu0 %29
  %v31 = vsel %vm27, %v26, 0.0
  %32 = vadd.xlane.f32.xlu0 %v31
  %v33 = vpop.xlane.xlu0 %32
  %v34 = vld [vmem:[#allocation2] sm:$0x1]
  %v36 = vlaneseq
  %v37 = vshrl.u32 %v36, 7
  %v38 = vsub.s32 0, %v37
  %v39 = vrot.slane %v34, %v38
  %v41 = vadd.f32 %v30, %v39
  %v42 = vadd.f32 %v33, %v39
  %vm43 = vcmask 7168
  %44 = vst.msk [vmem:[%s3] sm:$0xff] %vm43, %v41
  %45 = vst.msk [vmem:[%s3 + $0x8] sm:$0xff] %vm43, %v42
  // Predicated region
  $region14: #{forward.11} parent=0 // pred_check
    _
  $region15: #{forward.11} parent=0 // pred_check_branch
    %47 = sbr.rel (0) target = $region17
  $region16: #{forward.11} parent=0 // pred_region
    _
  $region17: #{forward.11} parent=0 // pred_fallthru
    _
  // Predicated region
  $region18: #{forward.11} parent=0 // pred_check
    _
  $region19: #{forward.11} parent=0 // pred_check_branch
    %49 = sbr.rel (0) target = $region21
  $region20: #{forward.11} parent=0 // pred_region
    _
  $region21: #{forward.11} parent=0 // pred_fallthru
    _

// kernel: forward.6
$region0: #{forward.6}
  #allocation0 [shape = 'u32[]', space=smem, size = 0x4, offset = 0x4, fixed_abs, tag = 'smem constant byte address 0x4 - core index']
  #allocation1 [shape = 'u32[144,128]{1,0:T(1,128)}', space=vmem, size = 0x12000, scoped, tag = 'internal scratch']
  %s0 = inlined_call_operand.vmem [shape: f32[16,40], index: 0, kind: input, shape index: {}]
  %s1 = inlined_call_operand.vmem [shape: f32[40,32], index: 1, kind: input, shape index: {}]
  %s2 = inlined_call_operand.vmem [shape: f32[1,32], index: 2, kind: input, shape index: {}]
  %s3 = inlined_call_operand.vmem [shape: f32[16,32], index: 3, kind: output, shape index: {}]
  %s4 = sld [smem:[#allocation0]]
  $region22: #{forward.6} parent=0
    _
  %s6 = ssub.s32 1, %s4
  %s7 = scalar_select 0, %s6, %s4
  // Predicated region
  $region2: #{forward.6} parent=0 // pred_check
    _
  $region3: #{forward.6} parent=0 // pred_check_branch
    %9 = sbr.rel (0) target = $region5
  $region4: #{forward.6} parent=0 // pred_region
    _
  $region5: #{forward.6} parent=0 // pred_fallthru
    _
  // Predicated region
  $region6: #{forward.6} parent=0 // pred_check
    _
  $region7: #{forward.6} parent=0 // pred_check_branch
    %11 = sbr.rel (0) target = $region9
  $region8: #{forward.6} parent=0 // pred_region
    _
  $region9: #{forward.6} parent=0 // pred_fallthru
    _
  // Predicated region
  $region10: #{forward.6} parent=0 // pred_check
    _
  $region11: #{forward.6} parent=0 // pred_check_branch
    %13 = sbr.rel (0) target = $region13
  $region12: #{forward.6} parent=0 // pred_region
    _
  $region13: #{forward.6} parent=0 // pred_fallthru
    _
  %v14 = vld [vmem:[%s0] sm:$0xff]
  %v15 = vld [vmem:[%s0 + $0x8] sm:$0xff]
  %v16 = vld [vmem:[%s1] sm:$0xff]
  %v17 = vld [vmem:[%s1 + $0x8] sm:$0xff]
  %v18 = vld [vmem:[%s1 + $0x10] sm:$0xff]
  %v19 = vld [vmem:[%s1 + $0x18] sm:$0xff]
  %v20 = vld [vmem:[%s1 + $0x20] sm:$0xff]
  %v21 = vld [vmem:[%s2] sm:$0x1]
  %v23 = vlaneseq
  %v24 = vshrl.u32 %v23, 7
  %v25 = vsub.s32 0, %v24
  %v26 = vrot.slane %v21, %v25
  %vm28 = vcmask 326656
  %v30 = vsel %vm28, %v14, 0
  %v33 = vsel %vm28, %v15, 0
  %35 = vmatprep.subr.mxu0 0.0
  %36 = vmatpush1.msra.mxu0 0.0
  %37 = vmatprep.subr.mxu0 0.0
  %38 = vmatpush1.msra.mxu0 0.0
  %39 = vmatprep.subr.mxu0 0.0
  %40 = vmatpush1.msra.mxu0 0.0
  %41 = vmatprep.subr.mxu0 0.0
  %42 = vmatpush1.msra.mxu0 0.0
  %43 = vmatprep.subr.mxu0 0.0
  %44 = vmatpush1.msra.mxu0 0.0
  %45 = vmatprep.subr.mxu0 0.0
  %46 = vmatpush1.msra.mxu0 0.0
  %47 = vmatprep.subr.mxu0 0.0
  %48 = vmatpush1.msra.mxu0 0.0
  %49 = vmatprep.subr.mxu0 0.0
  %50 = vmatpush1.msra.mxu0 0.0
  %51 = vmatprep.subr.mxu0 0.0
  %52 = vmatpush1.msra.mxu0 0.0
  %53 = vmatprep.subr.mxu0 0.0
  %54 = vmatpush1.msra.mxu0 0.0
  %55 = vmatprep.subr.mxu0 0.0
  %56 = vmatpush1.msra.mxu0 0.0
  %57 = vmatprep.subr.mxu0 0.0
  %58 = vmatpush1.msra.mxu0 %v20
  %59 = vmatprep.subr.mxu0 0.0
  %60 = vmatpush1.msra.mxu0 %v19
  %61 = vmatprep.subr.mxu0 0.0
  %62 = vmatpush1.msra.mxu0 %v18
  %63 = vmatprep.subr.mxu0 0.0
  %64 = vmatpush1.msra.mxu0 %v17
  %65 = vmatprep.subr.mxu0 0.0
  %66 = vmatpush1.msra.mxu0 %v16
  %67 = vmatprep.subr.mxu0 0.0
  %68 = vmatpush2.msra.mxu0 0.0
  %69 = vmatprep.subr.mxu0 0.0
  %70 = vmatpush2.msra.mxu0 0.0
  %71 = vmatprep.subr.mxu0 0.0
  %72 = vmatpush2.msra.mxu0 0.0
  %73 = vmatprep.subr.mxu0 0.0
  %74 = vmatpush2.msra.mxu0 0.0
  %75 = vmatprep.subr.mxu0 0.0
  %76 = vmatpush2.msra.mxu0 0.0
  %77 = vmatprep.subr.mxu0 0.0
  %78 = vmatpush2.msra.mxu0 0.0
  %79 = vmatprep.subr.mxu0 0.0
  %80 = vmatpush2.msra.mxu0 0.0
  %81 = vmatprep.subr.mxu0 0.0
  %82 = vmatpush2.msra.mxu0 0.0
  %83 = vmatprep.subr.mxu0 0.0
  %84 = vmatpush2.msra.mxu0 0.0
  %85 = vmatprep.subr.mxu0 0.0
  %86 = vmatpush2.msra.mxu0 0.0
  %87 = vmatprep.subr.mxu0 0.0
  %88 = vmatpush2.msra.mxu0 0.0
  %89 = vmatprep.subr.mxu0 0.0
  %90 = vmatpush2.msra.mxu0 0.0
  %91 = vmatprep.subr.mxu0 0.0
  %92 = vmatpush2.msra.mxu0 0.0
  %93 = vmatprep.subr.mxu0 0.0
  %94 = vmatpush2.msra.mxu0 0.0
  %95 = vmatprep.subr.mxu0 0.0
  %96 = vmatpush2.msra.mxu0 0.0
  %97 = vmatprep.subr.mxu0 0.0
  %98 = vmatpush2.msra.mxu0 0.0
  %99 = vmatprep.mubr.f32.mxu0 0.0
  %100 = vmatmul.mubr.f32.gmra.mxu0 %v30
  %v101 = vpop.f32.mrf.mxu0
  %v102 = vadd.f32 %v26, %v101
  %v103 = vpop.f32.mrf.mxu0
  %104 = vmatprep.mubr.f32.mxu0 0.0
  %105 = vmatmul.mubr.f32.gmra.mxu0 %v33
  %v106 = vpop.f32.mrf.mxu0
  %v107 = vadd.f32 %v26, %v106
  %v108 = vpop.f32.mrf.mxu0
  %109 = vdwg.mxu0
  %vm110 = vcmask 261120
  %111 = vst.msk [vmem:[%s3] sm:$0xff] %vm110, %v102
  %112 = vst.msk [vmem:[%s3 + $0x8] sm:$0xff] %vm110, %v107
  // Predicated region
  $region14: #{forward.6} parent=0 // pred_check
    _
  $region15: #{forward.6} parent=0 // pred_check_branch
    %114 = sbr.rel (0) target = $region17
  $region16: #{forward.6} parent=0 // pred_region
    _
  $region17: #{forward.6} parent=0 // pred_fallthru
    _
  // Predicated region
  $region18: #{forward.6} parent=0 // pred_check
    _
  $region19: #{forward.6} parent=0 // pred_check_branch
    %116 = sbr.rel (0) target = $region21
  $region20: #{forward.6} parent=0 // pred_region
    _
  $region21: #{forward.6} parent=0 // pred_fallthru
    _

// kernel: forward.7
$region0: #{forward.7}
  #allocation0 [shape = 'u32[]', space=smem, size = 0x4, offset = 0x4, fixed_abs, tag = 'smem constant byte address 0x4 - core index']
  #allocation1 [shape = 'u32[144,128]{1,0:T(1,128)}', space=vmem, size = 0x12000, scoped, tag = 'internal scratch']
  %s0 = inlined_call_operand.vmem [shape: f32[64,32], index: 0, kind: input, shape index: {}]
  %s1 = inlined_call_operand.vmem [shape: f32[32,128], index: 1, kind: input, shape index: {}]
  %s2 = inlined_call_operand.vmem [shape: f32[1,128], index: 2, kind: input, shape index: {}]
  %s3 = inlined_call_operand.vmem [shape: f32[64,128], index: 3, kind: output, shape index: {}]
  %s4 = sld [smem:[#allocation0]]
  $region22: #{forward.7} parent=0
    _
  %s6 = ssub.s32 1, %s4
  %s7 = scalar_select 0, %s6, %s4
  // Predicated region
  $region2: #{forward.7} parent=0 // pred_check
    _
  $region3: #{forward.7} parent=0 // pred_check_branch
    %9 = sbr.rel (0) target = $region5
  $region4: #{forward.7} parent=0 // pred_region
    _
  $region5: #{forward.7} parent=0 // pred_fallthru
    _
  // Predicated region
  $region6: #{forward.7} parent=0 // pred_check
    _
  $region7: #{forward.7} parent=0 // pred_check_branch
    %11 = sbr.rel (0) target = $region9
  $region8: #{forward.7} parent=0 // pred_region
    _
  $region9: #{forward.7} parent=0 // pred_fallthru
    _
  // Predicated region
  $region10: #{forward.7} parent=0 // pred_check
    _
  $region11: #{forward.7} parent=0 // pred_check_branch
    %13 = sbr.rel (0) target = $region13
  $region12: #{forward.7} parent=0 // pred_region
    _
  $region13: #{forward.7} parent=0 // pred_fallthru
    _
  %v14 = vld [vmem:[%s0] sm:$0xff]
  %v15 = vld [vmem:[%s0 + $0x8] sm:$0xff]
  %v16 = vld [vmem:[%s0 + $0x10] sm:$0xff]
  %v17 = vld [vmem:[%s0 + $0x18] sm:$0xff]
  %v18 = vld [vmem:[%s0 + $0x20] sm:$0xff]
  %v19 = vld [vmem:[%s0 + $0x28] sm:$0xff]
  %v20 = vld [vmem:[%s0 + $0x30] sm:$0xff]
  %v21 = vld [vmem:[%s0 + $0x38] sm:$0xff]
  %v22 = vld [vmem:[%s1] sm:$0xff]
  %v23 = vld [vmem:[%s1 + $0x8] sm:$0xff]
  %v24 = vld [vmem:[%s1 + $0x10] sm:$0xff]
  %v25 = vld [vmem:[%s1 + $0x18] sm:$0xff]
  %v26 = vld [vmem:[%s2] sm:$0x1]
  %v28 = vlaneseq
  %v29 = vshrl.u32 %v28, 7
  %v30 = vsub.s32 0, %v29
  %v31 = vrot.slane %v26, %v30
  %vm33 = vcmask 261120
  %v35 = vsel %vm33, %v14, 0
  %v38 = vsel %vm33, %v15, 0
  %v41 = vsel %vm33, %v16, 0
  %v44 = vsel %vm33, %v17, 0
  %v47 = vsel %vm33, %v18, 0
  %v50 = vsel %vm33, %v19, 0
  %v53 = vsel %vm33, %v20, 0
  %v56 = vsel %vm33, %v21, 0
  %58 = vmatprep.subr.mxu0 0.0
  %59 = vmatpush1.msra.mxu0 0.0
  %60 = vmatprep.subr.mxu0 0.0
  %61 = vmatpush1.msra.mxu0 0.0
  %62 = vmatprep.subr.mxu0 0.0
  %63 = vmatpush1.msra.mxu0 0.0
  %64 = vmatprep.subr.mxu0 0.0
  %65 = vmatpush1.msra.mxu0 0.0
  %66 = vmatprep.subr.mxu0 0.0
  %67 = vmatpush1.msra.mxu0 0.0
  %68 = vmatprep.subr.mxu0 0.0
  %69 = vmatpush1.msra.mxu0 0.0
  %70 = vmatprep.subr.mxu0 0.0
  %71 = vmatpush1.msra.mxu0 0.0
  %72 = vmatprep.subr.mxu0 0.0
  %73 = vmatpush1.msra.mxu0 0.0
  %74 = vmatprep.subr.mxu0 0.0
  %75 = vmatpush1.msra.mxu0 0.0
  %76 = vmatprep.subr.mxu0 0.0
  %77 = vmatpush1.msra.mxu0 0.0
  %78 = vmatprep.subr.mxu0 0.0
  %79 = vmatpush1.msra.mxu0 0.0
  %80 = vmatprep.subr.mxu0 0.0
  %81 = vmatpush1.msra.mxu0 0.0
  %82 = vmatprep.subr.mxu0 0.0
  %83 = vmatpush1.msra.mxu0 %v25
  %84 = vmatprep.subr.mxu0 0.0
  %85 = vmatpush1.msra.mxu0 %v24
  %86 = vmatprep.subr.mxu0 0.0
  %87 = vmatpush1.msra.mxu0 %v23
  %88 = vmatprep.subr.mxu0 0.0
  %89 = vmatpush1.msra.mxu0 %v22
  %90 = vmatprep.subr.mxu0 0.0
  %91 = vmatpush2.msra.mxu0 0.0
  %92 = vmatprep.subr.mxu0 0.0
  %93 = vmatpush2.msra.mxu0 0.0
  %94 = vmatprep.subr.mxu0 0.0
  %95 = vmatpush2.msra.mxu0 0.0
  %96 = vmatprep.subr.mxu0 0.0
  %97 = vmatpush2.msra.mxu0 0.0
  %98 = vmatprep.subr.mxu0 0.0
  %99 = vmatpush2.msra.mxu0 0.0
  %100 = vmatprep.subr.mxu0 0.0
  %101 = vmatpush2.msra.mxu0 0.0
  %102 = vmatprep.subr.mxu0 0.0
  %103 = vmatpush2.msra.mxu0 0.0
  %104 = vmatprep.subr.mxu0 0.0
  %105 = vmatpush2.msra.mxu0 0.0
  %106 = vmatprep.subr.mxu0 0.0
  %107 = vmatpush2.msra.mxu0 0.0
  %108 = vmatprep.subr.mxu0 0.0
  %109 = vmatpush2.msra.mxu0 0.0
  %110 = vmatprep.subr.mxu0 0.0
  %111 = vmatpush2.msra.mxu0 0.0
  %112 = vmatprep.subr.mxu0 0.0
  %113 = vmatpush2.msra.mxu0 0.0
  %114 = vmatprep.subr.mxu0 0.0
  %115 = vmatpush2.msra.mxu0 0.0
  %116 = vmatprep.subr.mxu0 0.0
  %117 = vmatpush2.msra.mxu0 0.0
  %118 = vmatprep.subr.mxu0 0.0
  %119 = vmatpush2.msra.mxu0 0.0
  %120 = vmatprep.subr.mxu0 0.0
  %121 = vmatpush2.msra.mxu0 0.0
  %122 = vmatprep.mubr.f32.mxu0 0.0
  %123 = vmatmul.mubr.f32.gmra.mxu0 %v35
  %v124 = vpop.f32.mrf.mxu0
  %v125 = vadd.f32 %v31, %v124
  %v126 = vpop.f32.mrf.mxu0
  %127 = vmatprep.mubr.f32.mxu0 0.0
  %128 = vmatmul.mubr.f32.gmra.mxu0 %v38
  %v129 = vpop.f32.mrf.mxu0
  %v130 = vadd.f32 %v31, %v129
  %v131 = vpop.f32.mrf.mxu0
  %132 = vmatprep.mubr.f32.mxu0 0.0
  %133 = vmatmul.mubr.f32.gmra.mxu0 %v41
  %v134 = vpop.f32.mrf.mxu0
  %v135 = vadd.f32 %v31, %v134
  %v136 = vpop.f32.mrf.mxu0
  %137 = vmatprep.mubr.f32.mxu0 0.0
  %138 = vmatmul.mubr.f32.gmra.mxu0 %v44
  %v139 = vpop.f32.mrf.mxu0
  %v140 = vadd.f32 %v31, %v139
  %v141 = vpop.f32.mrf.mxu0
  %142 = vmatprep.mubr.f32.mxu0 0.0
  %143 = vmatmul.mubr.f32.gmra.mxu0 %v47
  %v144 = vpop.f32.mrf.mxu0
  %v145 = vadd.f32 %v31, %v144
  %v146 = vpop.f32.mrf.mxu0
  %147 = vmatprep.mubr.f32.mxu0 0.0
  %148 = vmatmul.mubr.f32.gmra.mxu0 %v50
  %v149 = vpop.f32.mrf.mxu0
  %v150 = vadd.f32 %v31, %v149
  %v151 = vpop.f32.mrf.mxu0
  %152 = vmatprep.mubr.f32.mxu0 0.0
  %153 = vmatmul.mubr.f32.gmra.mxu0 %v53
  %v154 = vpop.f32.mrf.mxu0
  %v155 = vadd.f32 %v31, %v154
  %v156 = vpop.f32.mrf.mxu0
  %157 = vmatprep.mubr.f32.mxu0 0.0
  %158 = vmatmul.mubr.f32.gmra.mxu0 %v56
  %v159 = vpop.f32.mrf.mxu0
  %v160 = vadd.f32 %v31, %v159
  %v161 = vpop.f32.mrf.mxu0
  %162 = vdwg.mxu0
  %163 = vst [vmem:[%s3] sm:$0xff] %v125
  %164 = vst [vmem:[%s3 + $0x8] sm:$0xff] %v130
  %165 = vst [vmem:[%s3 + $0x10] sm:$0xff] %v135
  %166 = vst [vmem:[%s3 + $0x18] sm:$0xff] %v140
  %167 = vst [vmem:[%s3 + $0x20] sm:$0xff] %v145
  %168 = vst [vmem:[%s3 + $0x28] sm:$0xff] %v150
  %169 = vst [vmem:[%s3 + $0x30] sm:$0xff] %v155
  %170 = vst [vmem:[%s3 + $0x38] sm:$0xff] %v160
  // Predicated region
  $region14: #{forward.7} parent=0 // pred_check
    _
  $region15: #{forward.7} parent=0 // pred_check_branch
    %172 = sbr.rel (0) target = $region17
  $region16: #{forward.7} parent=0 // pred_region
    _
  $region17: #{forward.7} parent=0 // pred_fallthru
    _
  // Predicated region
  $region18: #{forward.7} parent=0 // pred_check
    _
  $region19: #{forward.7} parent=0 // pred_check_branch
    %174 = sbr.rel (0) target = $region21
  $region20: #{forward.7} parent=0 // pred_region
    _
  $region21: #{forward.7} parent=0 // pred_fallthru
    _

// kernel: forward.8
$region0: #{forward.8}
  #allocation0 [shape = 'u32[]', space=smem, size = 0x4, offset = 0x4, fixed_abs, tag = 'smem constant byte address 0x4 - core index']
  #allocation1 [shape = 'u32[144,128]{1,0:T(1,128)}', space=vmem, size = 0x12000, scoped, tag = 'internal scratch']
  #allocation2 [shape = 'f32[32,128]{1,0:T(8,128)}', space=vmem, size = 0x4000, scoped, tag = 'scratch operand']
  #allocation3 [shape = 'f32[8,32]{1,0:T(8,128)}', space=vmem, size = 0x1000, scoped, tag = 'scratch operand']
  #allocation4 [shape = 'f32[8,32]{1,0:T(8,128)}', space=vmem, size = 0x1000, scoped, tag = 'scratch operand']
  #allocation5 [shape = 's32[1]{0}', space=sflag, size = 0x4, scoped, tag = 'scratch operand']
  #allocation6 [shape = 's32[]', space=sflag, size = 0x4, offset = 0, fixed_abs, tag = 'sflag constant byte address 0x0 - dummy sync flag']
  %s0 = inlined_call_operand.vmem [shape: f32[8,8,128], index: 0, kind: input, shape index: {}]
  %s1 = inlined_call_operand.vmem [shape: f32[32,128], index: 1, kind: input, shape index: {}]
  %s2 = inlined_call_operand.vmem [shape: f32[8,8,32], index: 2, kind: output, shape index: {}]
  %s3 = sld [smem:[#allocation0]]
  $region52: #{forward.8} parent=0
    _
  %s5 = ssub.s32 1, %s3
  %s6 = scalar_select 0, %s5, %s3
  // Predicated region
  $region2: #{forward.8} parent=0 // pred_check
    _
  $region3: #{forward.8} parent=0 // pred_check_branch
    %8 = sbr.rel (0) target = $region5
  $region4: #{forward.8} parent=0 // pred_region
    _
  $region5: #{forward.8} parent=0 // pred_fallthru
    _
  %p9 = scmp.eq.s32.totalorder 0, 0
  // Predicated region
  $region6: #{forward.8} parent=0 // pred_check
    %p10 = pneg %p9
  $region7: #{forward.8} parent=0 // pred_check_branch
    %12 = sbr.rel (%p10) target = $region9
  $region8: #{forward.8} parent=0 // pred_region
    %p14 = scmp.lt.u32.totalorder 32, 8
    %p15 = pneg %p14
    // Predicated region
    $region10: #{forward.8} parent=8 // pred_check
      _
    $region11: #{forward.8} parent=8 // pred_check_branch
      %17 = sbr.rel (%p14) target = $region13
    $region12: #{forward.8} parent=8 // pred_region
      %s33 = sand.u32 32, 7
      %p34 = scmp.eq.s32.totalorder %s33, 0
      // Predicated region
      $region25: #{forward.8} parent=12 // pred_check
        %p35 = pneg %p34
      $region26: #{forward.8} parent=12 // pred_check_branch
        %37 = sbr.rel (%p35) target = $region28
      $region27: #{forward.8} parent=12 // pred_region
        loop: start=0, step=1, limit=1
        $region29: #{forward.8} parent=27 // loop_pre_header
          _
        $region30: #{forward.8} parent=27 // loop_header
          %s39 = sphi 0, %s43
          %p40 = scmp.ge.s32.totalorder %s39, 1
          %s44 = sphi %s1, %s1
          %s45 = sphi [#allocation2], [#allocation2]
        $region31: #{forward.8} parent=27 // loop_header_branch
          %42 = sbr.rel (%p40) target = $region35
        $region32: #{forward.8} parent=27 // loop_body
          %v46 = vld [vmem:[%s44] sm:$0xff]
          %47 = vst [vmem:[%s45] sm:$0xff] %v46
          %v48 = vld [vmem:[%s44 + $0x8] sm:$0xff]
          %49 = vst [vmem:[%s45 + $0x8] sm:$0xff] %v48
          %v50 = vld [vmem:[%s44 + $0x10] sm:$0xff]
          %51 = vst [vmem:[%s45 + $0x10] sm:$0xff] %v50
          %v52 = vld [vmem:[%s44 + $0x18] sm:$0xff]
          %53 = vst [vmem:[%s45 + $0x18] sm:$0xff] %v52
        $region33: #{forward.8} parent=27 // loop_footer
          %s43 = sadd.s32 1, %s39
        $region34: #{forward.8} parent=27 // loop_footer_branch
          %38 = sbr.rel target = $region30
        $region35: #{forward.8} parent=27 // loop_exit
          _
      $region28: #{forward.8} parent=12 // pred_fallthru
        _
      %p54 = pneg %p34
      // Predicated region
      $region36: #{forward.8} parent=12 // pred_check
        _
      $region37: #{forward.8} parent=12 // pred_check_branch
        %56 = sbr.rel (%p34) target = $region39
      $region38: #{forward.8} parent=12 // pred_region
        %s57 = sand.u32 32, 7
      $region39: #{forward.8} parent=12 // pred_fallthru
        _
    $region13: #{forward.8} parent=8 // pred_fallthru
      _
    // Predicated region
    $region14: #{forward.8} parent=8 // pred_check
      %p18 = pneg %p14
    $region15: #{forward.8} parent=8 // pred_check_branch
      %20 = sbr.rel (%p18) target = $region17
    $region16: #{forward.8} parent=8 // pred_region
      %s21 = sshll.u32 1, 32
      %s22 = ssub.s32 %s21, 1
      loop: start=0, step=1, limit=1
      $region18: #{forward.8} parent=16 // loop_pre_header
        _
      $region19: #{forward.8} parent=16 // loop_header
        %s24 = sphi 0, %s28
        %p25 = scmp.ge.s32.totalorder %s24, 1
        %s29 = sphi %s1, %s1
        %s30 = sphi [#allocation2], [#allocation2]
      $region20: #{forward.8} parent=16 // loop_header_branch
        %27 = sbr.rel (%p25) target = $region24
      $region21: #{forward.8} parent=16 // loop_body
        %v31 = vld [vmem:[%s29] sm:%s22]
        %32 = vst [vmem:[%s30] sm:%s22] %v31
      $region22: #{forward.8} parent=16 // loop_footer
        %s28 = sadd.s32 1, %s24
      $region23: #{forward.8} parent=16 // loop_footer_branch
        %23 = sbr.rel target = $region19
      $region24: #{forward.8} parent=16 // loop_exit
        _
    $region17: #{forward.8} parent=8 // pred_fallthru
      _
    // Predicated region
    $region40: #{forward.8} parent=8 // pred_check
      _
    $region41: #{forward.8} parent=8 // pred_check_branch
      %60 = sbr.rel (0) target = $region43
    $region42: #{forward.8} parent=8 // pred_region
      %61 = vsyncadd [#allocation5], 512
    $region43: #{forward.8} parent=8 // pred_fallthru
      _
    %s62 = smul.u32 32, 1
    %s63 = sshll.u32 %s62, 4
    %64 = dma.done [#allocation5], %s63
    %vm65 = vcmask 261120
    %66 = vst.msk [vmem:[#allocation3] sm:$0xff] %vm65, 0.0
    %67 = vst.msk [vmem:[#allocation4] sm:$0xff] %vm65, 0.0
  $region9: #{forward.8} parent=0 // pred_fallthru
    _
  %v68 = vld [vmem:[#allocation2] sm:$0xff]
  %v69 = vld [vmem:[#allocation2 + $0x8] sm:$0xff]
  %v70 = vld [vmem:[#allocation2 + $0x10] sm:$0xff]
  %v71 = vld [vmem:[#allocation2 + $0x18] sm:$0xff]
  %v72 = vld [vmem:[%s0] sm:$0xff]
  %v73 = vld [vmem:[#allocation3] sm:$0xff]
  %vm74 = vcmask 261120
  %v76 = vsel %vm74, %v73, 0
  %78 = vmatprep.subr.mxu0 0.0
  %79 = vmatpush1.msra.mxu0 0.0
  %80 = vmatprep.subr.mxu0 0.0
  %81 = vmatpush1.msra.mxu0 0.0
  %82 = vmatprep.subr.mxu0 0.0
  %83 = vmatpush1.msra.mxu0 0.0
  %84 = vmatprep.subr.mxu0 0.0
  %85 = vmatpush1.msra.mxu0 0.0
  %86 = vmatprep.subr.mxu0 0.0
  %87 = vmatpush1.msra.mxu0 0.0
  %88 = vmatprep.subr.mxu0 0.0
  %89 = vmatpush1.msra.mxu0 0.0
  %90 = vmatprep.subr.mxu0 0.0
  %91 = vmatpush1.msra.mxu0 0.0
  %92 = vmatprep.subr.mxu0 0.0
  %93 = vmatpush1.msra.mxu0 0.0
  %94 = vmatprep.subr.mxu0 0.0
  %95 = vmatpush1.msra.mxu0 0.0
  %96 = vmatprep.subr.mxu0 0.0
  %97 = vmatpush1.msra.mxu0 0.0
  %98 = vmatprep.subr.mxu0 0.0
  %99 = vmatpush1.msra.mxu0 0.0
  %100 = vmatprep.subr.mxu0 0.0
  %101 = vmatpush1.msra.mxu0 0.0
  %102 = vmatprep.subr.mxu0 0.0
  %103 = vmatpush1.msra.mxu0 %v71
  %104 = vmatprep.subr.mxu0 0.0
  %105 = vmatpush1.msra.mxu0 %v70
  %106 = vmatprep.subr.mxu0 0.0
  %107 = vmatpush1.msra.mxu0 %v69
  %108 = vmatprep.subr.mxu0 0.0
  %109 = vmatpush1.msra.mxu0 %v68
  %110 = vmatprep.subr.mxu0 0.0
  %111 = vmatpush2.msra.mxu0 0.0
  %112 = vmatprep.subr.mxu0 0.0
  %113 = vmatpush2.msra.mxu0 0.0
  %114 = vmatprep.subr.mxu0 0.0
  %115 = vmatpush2.msra.mxu0 0.0
  %116 = vmatprep.subr.mxu0 0.0
  %117 = vmatpush2.msra.mxu0 0.0
  %118 = vmatprep.subr.mxu0 0.0
  %119 = vmatpush2.msra.mxu0 0.0
  %120 = vmatprep.subr.mxu0 0.0
  %121 = vmatpush2.msra.mxu0 0.0
  %122 = vmatprep.subr.mxu0 0.0
  %123 = vmatpush2.msra.mxu0 0.0
  %124 = vmatprep.subr.mxu0 0.0
  %125 = vmatpush2.msra.mxu0 0.0
  %126 = vmatprep.subr.mxu0 0.0
  %127 = vmatpush2.msra.mxu0 0.0
  %128 = vmatprep.subr.mxu0 0.0
  %129 = vmatpush2.msra.mxu0 0.0
  %130 = vmatprep.subr.mxu0 0.0
  %131 = vmatpush2.msra.mxu0 0.0
  %132 = vmatprep.subr.mxu0 0.0
  %133 = vmatpush2.msra.mxu0 0.0
  %134 = vmatprep.subr.mxu0 0.0
  %135 = vmatpush2.msra.mxu0 0.0
  %136 = vmatprep.subr.mxu0 0.0
  %137 = vmatpush2.msra.mxu0 0.0
  %138 = vmatprep.subr.mxu0 0.0
  %139 = vmatpush2.msra.mxu0 0.0
  %140 = vmatprep.subr.mxu0 0.0
  %141 = vmatpush2.msra.mxu0 0.0
  %142 = vmatprep.mubr.f32.mxu0 0.0
  %143 = vmatmul.mubr.f32.gmra.mxu0 %v76
  %v144 = vpop.f32.mrf.mxu0
  %v145 = vadd.f32 0.0, %v144
  %v146 = vpop.f32.mrf.mxu0
  %147 = vdwg.mxu0
  %v148 = vadd.f32 %v72, %v145
  %v149 = vxor.u32 %v148, 2147483648
  %v150 = vmul.f32 %v149, 1.442695
  %v151 = vpow.pop %v150
  %v152 = vadd.f32 %v151, 1.0
  %v153 = vrcp.pop %v152
  %v154 = vmul.f32 1.0, %v153
  %v155 = vtanh.pop %v148
  %v156 = vld [vmem:[#allocation4] sm:$0xff]
  %158 = vrot.lane.b32.xlu0 %v156, 32
  %v159 = vpop.permute.xlu0 %158
  %v161 = vmul.f32 %v154, %v159
  %163 = vrot.lane.b32.xlu0 %v155, 64
  %v164 = vpop.permute.xlu0 %163
  %v166 = vmul.f32 %v154, %v164
  %168 = vrot.lane.b32.xlu0 %v166, 32
  %v169 = vpop.permute.xlu0 %168
  %v171 = vadd.f32 %v161, %v169
  %v172 = vtanh.pop %v171
  %174 = vrot.lane.b32.xlu0 %v172, 64
  %v175 = vpop.permute.xlu0 %174
  %v177 = vmul.f32 %v154, %v175
  %179 = vrot.lane.b32.xlu0 %v171, 96
  %v180 = vpop.permute.xlu0 %179
  %182 = vst.msk [vmem:[#allocation4] sm:$0xff] %vm74, %v180
  %184 = vrot.lane.b32.xlu0 %v177, 32
  %v185 = vpop.permute.xlu0 %184
  %187 = vst.msk [vmem:[#allocation3] sm:$0xff] %vm74, %v185
  %188 = vst.msk [vmem:[%s2] sm:$0xff] %vm74, %v185
  %s189 = scalar_lea.vmem %s0, 8
  %v190 = vld [vmem:[%s189] sm:$0xff]
  %v191 = vld [vmem:[#allocation3] sm:$0xff]
  %v193 = vsel %vm74, %v191, 0
  %195 = vmatprep.subr.mxu0 0.0
  %196 = vmatpush1.msra.mxu0 0.0
  %197 = vmatprep.subr.mxu0 0.0
  %198 = vmatpush1.msra.mxu0 0.0
  %199 = vmatprep.subr.mxu0 0.0
  %200 = vmatpush1.msra.mxu0 0.0
  %201 = vmatprep.subr.mxu0 0.0
  %202 = vmatpush1.msra.mxu0 0.0
  %203 = vmatprep.subr.mxu0 0.0
  %204 = vmatpush1.msra.mxu0 0.0
  %205 = vmatprep.subr.mxu0 0.0
  %206 = vmatpush1.msra.mxu0 0.0
  %207 = vmatprep.subr.mxu0 0.0
  %208 = vmatpush1.msra.mxu0 0.0
  %209 = vmatprep.subr.mxu0 0.0
  %210 = vmatpush1.msra.mxu0 0.0
  %211 = vmatprep.subr.mxu0 0.0
  %212 = vmatpush1.msra.mxu0 0.0
  %213 = vmatprep.subr.mxu0 0.0
  %214 = vmatpush1.msra.mxu0 0.0
  %215 = vmatprep.subr.mxu0 0.0
  %216 = vmatpush1.msra.mxu0 0.0
  %217 = vmatprep.subr.mxu0 0.0
  %218 = vmatpush1.msra.mxu0 0.0
  %219 = vmatprep.subr.mxu0 0.0
  %220 = vmatpush1.msra.mxu0 %v71
  %221 = vmatprep.subr.mxu0 0.0
  %222 = vmatpush1.msra.mxu0 %v70
  %223 = vmatprep.subr.mxu0 0.0
  %224 = vmatpush1.msra.mxu0 %v69
  %225 = vmatprep.subr.mxu0 0.0
  %226 = vmatpush1.msra.mxu0 %v68
  %227 = vmatprep.subr.mxu0 0.0
  %228 = vmatpush2.msra.mxu0 0.0
  %229 = vmatprep.subr.mxu0 0.0
  %230 = vmatpush2.msra.mxu0 0.0
  %231 = vmatprep.subr.mxu0 0.0
  %232 = vmatpush2.msra.mxu0 0.0
  %233 = vmatprep.subr.mxu0 0.0
  %234 = vmatpush2.msra.mxu0 0.0
  %235 = vmatprep.subr.mxu0 0.0
  %236 = vmatpush2.msra.mxu0 0.0
  %237 = vmatprep.subr.mxu0 0.0
  %238 = vmatpush2.msra.mxu0 0.0
  %239 = vmatprep.subr.mxu0 0.0
  %240 = vmatpush2.msra.mxu0 0.0
  %241 = vmatprep.subr.mxu0 0.0
  %242 = vmatpush2.msra.mxu0 0.0
  %243 = vmatprep.subr.mxu0 0.0
  %244 = vmatpush2.msra.mxu0 0.0
  %245 = vmatprep.subr.mxu0 0.0
  %246 = vmatpush2.msra.mxu0 0.0
  %247 = vmatprep.subr.mxu0 0.0
  %248 = vmatpush2.msra.mxu0 0.0
  %249 = vmatprep.subr.mxu0 0.0
  %250 = vmatpush2.msra.mxu0 0.0
  %251 = vmatprep.subr.mxu0 0.0
  %252 = vmatpush2.msra.mxu0 0.0
  %253 = vmatprep.subr.mxu0 0.0
  %254 = vmatpush2.msra.mxu0 0.0
  %255 = vmatprep.subr.mxu0 0.0
  %256 = vmatpush2.msra.mxu0 0.0
  %257 = vmatprep.subr.mxu0 0.0
  %258 = vmatpush2.msra.mxu0 0.0
  %259 = vmatprep.mubr.f32.mxu0 0.0
  %260 = vmatmul.mubr.f32.gmra.mxu0 %v193
  %v261 = vpop.f32.mrf.mxu0
  %v262 = vadd.f32 0.0, %v261
  %v263 = vpop.f32.mrf.mxu0
  %264 = vdwg.mxu0
  %v265 = vadd.f32 %v190, %v262
  %v266 = vxor.u32 %v265, 2147483648
  %v267 = vmul.f32 %v266, 1.442695
  %v268 = vpow.pop %v267
  %v269 = vadd.f32 %v268, 1.0
  %v270 = vrcp.pop %v269
  %v271 = vmul.f32 1.0, %v270
  %v272 = vtanh.pop %v265
  %v273 = vld [vmem:[#allocation4] sm:$0xff]
  %275 = vrot.lane.b32.xlu0 %v273, 32
  %v276 = vpop.permute.xlu0 %275
  %v278 = vmul.f32 %v271, %v276
  %280 = vrot.lane.b32.xlu0 %v272, 64
  %v281 = vpop.permute.xlu0 %280
  %v283 = vmul.f32 %v271, %v281
  %285 = vrot.lane.b32.xlu0 %v283, 32
  %v286 = vpop.permute.xlu0 %285
  %v288 = vadd.f32 %v278, %v286
  %v289 = vtanh.pop %v288
  %291 = vrot.lane.b32.xlu0 %v289, 64
  %v292 = vpop.permute.xlu0 %291
  %v294 = vmul.f32 %v271, %v292
  %296 = vrot.lane.b32.xlu0 %v288, 96
  %v297 = vpop.permute.xlu0 %296
  %299 = vst.msk [vmem:[#allocation4] sm:$0xff] %vm74, %v297
  %301 = vrot.lane.b32.xlu0 %v294, 32
  %v302 = vpop.permute.xlu0 %301
  %304 = vst.msk [vmem:[#allocation3] sm:$0xff] %vm74, %v302
  %s305 = scalar_lea.vmem %s2, 8
  %306 = vst.msk [vmem:[%s305] sm:$0xff] %vm74, %v302
  %s307 = scalar_lea.vmem %s0, 16
  %v308 = vld [vmem:[%s307] sm:$0xff]
  %v309 = vld [vmem:[#allocation3] sm:$0xff]
  %v311 = vsel %vm74, %v309, 0
  %313 = vmatprep.subr.mxu0 0.0
  %314 = vmatpush1.msra.mxu0 0.0
  %315 = vmatprep.subr.mxu0 0.0
  %316 = vmatpush1.msra.mxu0 0.0
  %317 = vmatprep.subr.mxu0 0.0
  %318 = vmatpush1.msra.mxu0 0.0
  %319 = vmatprep.subr.mxu0 0.0
  %320 = vmatpush1.msra.mxu0 0.0
  %321 = vmatprep.subr.mxu0 0.0
  %322 = vmatpush1.msra.mxu0 0.0
  %323 = vmatprep.subr.mxu0 0.0
  %324 = vmatpush1.msra.mxu0 0.0
  %325 = vmatprep.subr.mxu0 0.0
  %326 = vmatpush1.msra.mxu0 0.0
  %327 = vmatprep.subr.mxu0 0.0
  %328 = vmatpush1.msra.mxu0 0.0
  %329 = vmatprep.subr.mxu0 0.0
  %330 = vmatpush1.msra.mxu0 0.0
  %331 = vmatprep.subr.mxu0 0.0
  %332 = vmatpush1.msra.mxu0 0.0
  %333 = vmatprep.subr.mxu0 0.0
  %334 = vmatpush1.msra.mxu0 0.0
  %335 = vmatprep.subr.mxu0 0.0
  %336 = vmatpush1.msra.mxu0 0.0
  %337 = vmatprep.subr.mxu0 0.0
  %338 = vmatpush1.msra.mxu0 %v71
  %339 = vmatprep.subr.mxu0 0.0
  %340 = vmatpush1.msra.mxu0 %v70
  %341 = vmatprep.subr.mxu0 0.0
  %342 = vmatpush1.msra.mxu0 %v69
  %343 = vmatprep.subr.mxu0 0.0
  %344 = vmatpush1.msra.mxu0 %v68
  %345 = vmatprep.subr.mxu0 0.0
  %346 = vmatpush2.msra.mxu0 0.0
  %347 = vmatprep.subr.mxu0 0.0
  %348 = vmatpush2.msra.mxu0 0.0
  %349 = vmatprep.subr.mxu0 0.0
  %350 = vmatpush2.msra.mxu0 0.0
  %351 = vmatprep.subr.mxu0 0.0
  %352 = vmatpush2.msra.mxu0 0.0
  %353 = vmatprep.subr.mxu0 0.0
  %354 = vmatpush2.msra.mxu0 0.0
  %355 = vmatprep.subr.mxu0 0.0
  %356 = vmatpush2.msra.mxu0 0.0
  %357 = vmatprep.subr.mxu0 0.0
  %358 = vmatpush2.msra.mxu0 0.0
  %359 = vmatprep.subr.mxu0 0.0
  %360 = vmatpush2.msra.mxu0 0.0
  %361 = vmatprep.subr.mxu0 0.0
  %362 = vmatpush2.msra.mxu0 0.0
  %363 = vmatprep.subr.mxu0 0.0
  %364 = vmatpush2.msra.mxu0 0.0
  %365 = vmatprep.subr.mxu0 0.0
  %366 = vmatpush2.msra.mxu0 0.0
  %367 = vmatprep.subr.mxu0 0.0
  %368 = vmatpush2.msra.mxu0 0.0
  %369 = vmatprep.subr.mxu0 0.0
  %370 = vmatpush2.msra.mxu0 0.0
  %371 = vmatprep.subr.mxu0 0.0
  %372 = vmatpush2.msra.mxu0 0.0
  %373 = vmatprep.subr.mxu0 0.0
  %374 = vmatpush2.msra.mxu0 0.0
  %375 = vmatprep.subr.mxu0 0.0
  %376 = vmatpush2.msra.mxu0 0.0
  %377 = vmatprep.mubr.f32.mxu0 0.0
  %378 = vmatmul.mubr.f32.gmra.mxu0 %v311
  %v379 = vpop.f32.mrf.mxu0
  %v380 = vadd.f32 0.0, %v379
  %v381 = vpop.f32.mrf.mxu0
  %382 = vdwg.mxu0
  %v383 = vadd.f32 %v308, %v380
  %v384 = vxor.u32 %v383, 2147483648
  %v385 = vmul.f32 %v384, 1.442695
  %v386 = vpow.pop %v385
  %v387 = vadd.f32 %v386, 1.0
  %v388 = vrcp.pop %v387
  %v389 = vmul.f32 1.0, %v388
  %v390 = vtanh.pop %v383
  %v391 = vld [vmem:[#allocation4] sm:$0xff]
  %393 = vrot.lane.b32.xlu0 %v391, 32
  %v394 = vpop.permute.xlu0 %393
  %v396 = vmul.f32 %v389, %v394
  %398 = vrot.lane.b32.xlu0 %v390, 64
  %v399 = vpop.permute.xlu0 %398
  %v401 = vmul.f32 %v389, %v399
  %403 = vrot.lane.b32.xlu0 %v401, 32
  %v404 = vpop.permute.xlu0 %403
  %v406 = vadd.f32 %v396, %v404
  %v407 = vtanh.pop %v406
  %409 = vrot.lane.b32.xlu0 %v407, 64
  %v410 = vpop.permute.xlu0 %409
  %v412 = vmul.f32 %v389, %v410
  %414 = vrot.lane.b32.xlu0 %v406, 96
  %v415 = vpop.permute.xlu0 %414
  %417 = vst.msk [vmem:[#allocation4] sm:$0xff] %vm74, %v415
  %419 = vrot.lane.b32.xlu0 %v412, 32
  %v420 = vpop.permute.xlu0 %419
  %422 = vst.msk [vmem:[#allocation3] sm:$0xff] %vm74, %v420
  %s423 = scalar_lea.vmem %s2, 16
  %424 = vst.msk [vmem:[%s423] sm:$0xff] %vm74, %v420
  %s425 = scalar_lea.vmem %s0, 24
  %v426 = vld [vmem:[%s425] sm:$0xff]
  %v427 = vld [vmem:[#allocation3] sm:$0xff]
  %v429 = vsel %vm74, %v427, 0
  %431 = vmatprep.subr.mxu0 0.0
  %432 = vmatpush1.msra.mxu0 0.0
  %433 = vmatprep.subr.mxu0 0.0
  %434 = vmatpush1.msra.mxu0 0.0
  %435 = vmatprep.subr.mxu0 0.0
  %436 = vmatpush1.msra.mxu0 0.0
  %437 = vmatprep.subr.mxu0 0.0
  %438 = vmatpush1.msra.mxu0 0.0
  %439 = vmatprep.subr.mxu0 0.0
  %440 = vmatpush1.msra.mxu0 0.0
  %441 = vmatprep.subr.mxu0 0.0
  %442 = vmatpush1.msra.mxu0 0.0
  %443 = vmatprep.subr.mxu0 0.0
  %444 = vmatpush1.msra.mxu0 0.0
  %445 = vmatprep.subr.mxu0 0.0
  %446 = vmatpush1.msra.mxu0 0.0
  %447 = vmatprep.subr.mxu0 0.0
  %448 = vmatpush1.msra.mxu0 0.0
  %449 = vmatprep.subr.mxu0 0.0
  %450 = vmatpush1.msra.mxu0 0.0
  %451 = vmatprep.subr.mxu0 0.0
  %452 = vmatpush1.msra.mxu0 0.0
  %453 = vmatprep.subr.mxu0 0.0
  %454 = vmatpush1.msra.mxu0 0.0
  %455 = vmatprep.subr.mxu0 0.0
  %456 = vmatpush1.msra.mxu0 %v71
  %457 = vmatprep.subr.mxu0 0.0
  %458 = vmatpush1.msra.mxu0 %v70
  %459 = vmatprep.subr.mxu0 0.0
  %460 = vmatpush1.msra.mxu0 %v69
  %461 = vmatprep.subr.mxu0 0.0
  %462 = vmatpush1.msra.mxu0 %v68
  %463 = vmatprep.subr.mxu0 0.0
  %464 = vmatpush2.msra.mxu0 0.0
  %465 = vmatprep.subr.mxu0 0.0
  %466 = vmatpush2.msra.mxu0 0.0
  %467 = vmatprep.subr.mxu0 0.0
  %468 = vmatpush2.msra.mxu0 0.0
  %469 = vmatprep.subr.mxu0 0.0
  %470 = vmatpush2.msra.mxu0 0.0
  %471 = vmatprep.subr.mxu0 0.0
  %472 = vmatpush2.msra.mxu0 0.0
  %473 = vmatprep.subr.mxu0 0.0
  %474 = vmatpush2.msra.mxu0 0.0
  %475 = vmatprep.subr.mxu0 0.0
  %476 = vmatpush2.msra.mxu0 0.0
  %477 = vmatprep.subr.mxu0 0.0
  %478 = vmatpush2.msra.mxu0 0.0
  %479 = vmatprep.subr.mxu0 0.0
  %480 = vmatpush2.msra.mxu0 0.0
  %481 = vmatprep.subr.mxu0 0.0
  %482 = vmatpush2.msra.mxu0 0.0
  %483 = vmatprep.subr.mxu0 0.0
  %484 = vmatpush2.msra.mxu0 0.0
  %485 = vmatprep.subr.mxu0 0.0
  %486 = vmatpush2.msra.mxu0 0.0
  %487 = vmatprep.subr.mxu0 0.0
  %488 = vmatpush2.msra.mxu0 0.0
  %489 = vmatprep.subr.mxu0 0.0
  %490 = vmatpush2.msra.mxu0 0.0
  %491 = vmatprep.subr.mxu0 0.0
  %492 = vmatpush2.msra.mxu0 0.0
  %493 = vmatprep.subr.mxu0 0.0
  %494 = vmatpush2.msra.mxu0 0.0
  %495 = vmatprep.mubr.f32.mxu0 0.0
  %496 = vmatmul.mubr.f32.gmra.mxu0 %v429
  %v497 = vpop.f32.mrf.mxu0
  %v498 = vadd.f32 0.0, %v497
  %v499 = vpop.f32.mrf.mxu0
  %500 = vdwg.mxu0
  %v501 = vadd.f32 %v426, %v498
  %v502 = vxor.u32 %v501, 2147483648
  %v503 = vmul.f32 %v502, 1.442695
  %v504 = vpow.pop %v503
  %v505 = vadd.f32 %v504, 1.0
  %v506 = vrcp.pop %v505
  %v507 = vmul.f32 1.0, %v506
  %v508 = vtanh.pop %v501
  %v509 = vld [vmem:[#allocation4] sm:$0xff]
  %511 = vrot.lane.b32.xlu0 %v509, 32
  %v512 = vpop.permute.xlu0 %511
  %v514 = vmul.f32 %v507, %v512
  %516 = vrot.lane.b32.xlu0 %v508, 64
  %v517 = vpop.permute.xlu0 %516
  %v519 = vmul.f32 %v507, %v517
  %521 = vrot.lane.b32.xlu0 %v519, 32
  %v522 = vpop.permute.xlu0 %521
  %v524 = vadd.f32 %v514, %v522
  %v525 = vtanh.pop %v524
  %527 = vrot.lane.b32.xlu0 %v525, 64
  %v528 = vpop.permute.xlu0 %527
  %v530 = vmul.f32 %v507, %v528
  %532 = vrot.lane.b32.xlu0 %v524, 96
  %v533 = vpop.permute.xlu0 %532
  %535 = vst.msk [vmem:[#allocation4] sm:$0xff] %vm74, %v533
  %537 = vrot.lane.b32.xlu0 %v530, 32
  %v538 = vpop.permute.xlu0 %537
  %540 = vst.msk [vmem:[#allocation3] sm:$0xff] %vm74, %v538
  %s541 = scalar_lea.vmem %s2, 24
  %542 = vst.msk [vmem:[%s541] sm:$0xff] %vm74, %v538
  %s543 = scalar_lea.vmem %s0, 32
  %v544 = vld [vmem:[%s543] sm:$0xff]
  %v545 = vld [vmem:[#allocation3] sm:$0xff]
  %v547 = vsel %vm74, %v545, 0
  %549 = vmatprep.subr.mxu0 0.0
  %550 = vmatpush1.msra.mxu0 0.0
  %551 = vmatprep.subr.mxu0 0.0
  %552 = vmatpush1.msra.mxu0 0.0
  %553 = vmatprep.subr.mxu0 0.0
  %554 = vmatpush1.msra.mxu0 0.0
  %555 = vmatprep.subr.mxu0 0.0
  %556 = vmatpush1.msra.mxu0 0.0
  %557 = vmatprep.subr.mxu0 0.0
  %558 = vmatpush1.msra.mxu0 0.0
  %559 = vmatprep.subr.mxu0 0.0
  %560 = vmatpush1.msra.mxu0 0.0
  %561 = vmatprep.subr.mxu0 0.0
  %562 = vmatpush1.msra.mxu0 0.0
  %563 = vmatprep.subr.mxu0 0.0
  %564 = vmatpush1.msra.mxu0 0.0
  %565 = vmatprep.subr.mxu0 0.0
  %566 = vmatpush1.msra.mxu0 0.0
  %567 = vmatprep.subr.mxu0 0.0
  %568 = vmatpush1.msra.mxu0 0.0
  %569 = vmatprep.subr.mxu0 0.0
  %570 = vmatpush1.msra.mxu0 0.0
  %571 = vmatprep.subr.mxu0 0.0
  %572 = vmatpush1.msra.mxu0 0.0
  %573 = vmatprep.subr.mxu0 0.0
  %574 = vmatpush1.msra.mxu0 %v71
  %575 = vmatprep.subr.mxu0 0.0
  %576 = vmatpush1.msra.mxu0 %v70
  %577 = vmatprep.subr.mxu0 0.0
  %578 = vmatpush1.msra.mxu0 %v69
  %579 = vmatprep.subr.mxu0 0.0
  %580 = vmatpush1.msra.mxu0 %v68
  %581 = vmatprep.subr.mxu0 0.0
  %582 = vmatpush2.msra.mxu0 0.0
  %583 = vmatprep.subr.mxu0 0.0
  %584 = vmatpush2.msra.mxu0 0.0
  %585 = vmatprep.subr.mxu0 0.0
  %586 = vmatpush2.msra.mxu0 0.0
  %587 = vmatprep.subr.mxu0 0.0
  %588 = vmatpush2.msra.mxu0 0.0
  %589 = vmatprep.subr.mxu0 0.0
  %590 = vmatpush2.msra.mxu0 0.0
  %591 = vmatprep.subr.mxu0 0.0
  %592 = vmatpush2.msra.mxu0 0.0
  %593 = vmatprep.subr.mxu0 0.0
  %594 = vmatpush2.msra.mxu0 0.0
  %595 = vmatprep.subr.mxu0 0.0
  %596 = vmatpush2.msra.mxu0 0.0
  %597 = vmatprep.subr.mxu0 0.0
  %598 = vmatpush2.msra.mxu0 0.0
  %599 = vmatprep.subr.mxu0 0.0
  %600 = vmatpush2.msra.mxu0 0.0
  %601 = vmatprep.subr.mxu0 0.0
  %602 = vmatpush2.msra.mxu0 0.0
  %603 = vmatprep.subr.mxu0 0.0
  %604 = vmatpush2.msra.mxu0 0.0
  %605 = vmatprep.subr.mxu0 0.0
  %606 = vmatpush2.msra.mxu0 0.0
  %607 = vmatprep.subr.mxu0 0.0
  %608 = vmatpush2.msra.mxu0 0.0
  %609 = vmatprep.subr.mxu0 0.0
  %610 = vmatpush2.msra.mxu0 0.0
  %611 = vmatprep.subr.mxu0 0.0
  %612 = vmatpush2.msra.mxu0 0.0
  %613 = vmatprep.mubr.f32.mxu0 0.0
  %614 = vmatmul.mubr.f32.gmra.mxu0 %v547
  %v615 = vpop.f32.mrf.mxu0
  %v616 = vadd.f32 0.0, %v615
  %v617 = vpop.f32.mrf.mxu0
  %618 = vdwg.mxu0
  %v619 = vadd.f32 %v544, %v616
  %v620 = vxor.u32 %v619, 2147483648
  %v621 = vmul.f32 %v620, 1.442695
  %v622 = vpow.pop %v621
  %v623 = vadd.f32 %v622, 1.0
  %v624 = vrcp.pop %v623
  %v625 = vmul.f32 1.0, %v624
  %v626 = vtanh.pop %v619
  %v627 = vld [vmem:[#allocation4] sm:$0xff]
  %629 = vrot.lane.b32.xlu0 %v627, 32
  %v630 = vpop.permute.xlu0 %629
  %v632 = vmul.f32 %v625, %v630
  %634 = vrot.lane.b32.xlu0 %v626, 64
  %v635 = vpop.permute.xlu0 %634
  %v637 = vmul.f32 %v625, %v635
  %639 = vrot.lane.b32.xlu0 %v637, 32
  %v640 = vpop.permute.xlu0 %639
  %v642 = vadd.f32 %v632, %v640
  %v643 = vtanh.pop %v642
  %645 = vrot.lane.b32.xlu0 %v643, 64
  %v646 = vpop.permute.xlu0 %645
  %v648 = vmul.f32 %v625, %v646
  %650 = vrot.lane.b32.xlu0 %v642, 96
  %v651 = vpop.permute.xlu0 %650
  %653 = vst.msk [vmem:[#allocation4] sm:$0xff] %vm74, %v651
  %655 = vrot.lane.b32.xlu0 %v648, 32
  %v656 = vpop.permute.xlu0 %655
  %658 = vst.msk [vmem:[#allocation3] sm:$0xff] %vm74, %v656
  %s659 = scalar_lea.vmem %s2, 32
  %660 = vst.msk [vmem:[%s659] sm:$0xff] %vm74, %v656
  %s661 = scalar_lea.vmem %s0, 40
  %v662 = vld [vmem:[%s661] sm:$0xff]
  %v663 = vld [vmem:[#allocation3] sm:$0xff]
  %v665 = vsel %vm74, %v663, 0
  %667 = vmatprep.subr.mxu0 0.0
  %668 = vmatpush1.msra.mxu0 0.0
  %669 = vmatprep.subr.mxu0 0.0
  %670 = vmatpush1.msra.mxu0 0.0
  %671 = vmatprep.subr.mxu0 0.0
  %672 = vmatpush1.msra.mxu0 0.0
  %673 = vmatprep.subr.mxu0 0.0
  %674 = vmatpush1.msra.mxu0 0.0
  %675 = vmatprep.subr.mxu0 0.0
  %676 = vmatpush1.msra.mxu0 0.0
  %677 = vmatprep.subr.mxu0 0.0
  %678 = vmatpush1.msra.mxu0 0.0
  %679 = vmatprep.subr.mxu0 0.0
  %680 = vmatpush1.msra.mxu0 0.0
  %681 = vmatprep.subr.mxu0 0.0
  %682 = vmatpush1.msra.mxu0 0.0
  %683 = vmatprep.subr.mxu0 0.0
  %684 = vmatpush1.msra.mxu0 0.0
  %685 = vmatprep.subr.mxu0 0.0
  %686 = vmatpush1.msra.mxu0 0.0
  %687 = vmatprep.subr.mxu0 0.0
  %688 = vmatpush1.msra.mxu0 0.0
  %689 = vmatprep.subr.mxu0 0.0
  %690 = vmatpush1.msra.mxu0 0.0
  %691 = vmatprep.subr.mxu0 0.0
  %692 = vmatpush1.msra.mxu0 %v71
  %693 = vmatprep.subr.mxu0 0.0
  %694 = vmatpush1.msra.mxu0 %v70
  %695 = vmatprep.subr.mxu0 0.0
  %696 = vmatpush1.msra.mxu0 %v69
  %697 = vmatprep.subr.mxu0 0.0
  %698 = vmatpush1.msra.mxu0 %v68
  %699 = vmatprep.subr.mxu0 0.0
  %700 = vmatpush2.msra.mxu0 0.0
  %701 = vmatprep.subr.mxu0 0.0
  %702 = vmatpush2.msra.mxu0 0.0
  %703 = vmatprep.subr.mxu0 0.0
  %704 = vmatpush2.msra.mxu0 0.0
  %705 = vmatprep.subr.mxu0 0.0
  %706 = vmatpush2.msra.mxu0 0.0
  %707 = vmatprep.subr.mxu0 0.0
  %708 = vmatpush2.msra.mxu0 0.0
  %709 = vmatprep.subr.mxu0 0.0
  %710 = vmatpush2.msra.mxu0 0.0
  %711 = vmatprep.subr.mxu0 0.0
  %712 = vmatpush2.msra.mxu0 0.0
  %713 = vmatprep.subr.mxu0 0.0
  %714 = vmatpush2.msra.mxu0 0.0
  %715 = vmatprep.subr.mxu0 0.0
  %716 = vmatpush2.msra.mxu0 0.0
  %717 = vmatprep.subr.mxu0 0.0
  %718 = vmatpush2.msra.mxu0 0.0
  %719 = vmatprep.subr.mxu0 0.0
  %720 = vmatpush2.msra.mxu0 0.0
  %721 = vmatprep.subr.mxu0 0.0
  %722 = vmatpush2.msra.mxu0 0.0
  %723 = vmatprep.subr.mxu0 0.0
  %724 = vmatpush2.msra.mxu0 0.0
  %725 = vmatprep.subr.mxu0 0.0
  %726 = vmatpush2.msra.mxu0 0.0
  %727 = vmatprep.subr.mxu0 0.0
  %728 = vmatpush2.msra.mxu0 0.0
  %729 = vmatprep.subr.mxu0 0.0
  %730 = vmatpush2.msra.mxu0 0.0
  %731 = vmatprep.mubr.f32.mxu0 0.0
  %732 = vmatmul.mubr.f32.gmra.mxu0 %v665
  %v733 = vpop.f32.mrf.mxu0
  %v734 = vadd.f32 0.0, %v733
  %v735 = vpop.f32.mrf.mxu0
  %736 = vdwg.mxu0
  %v737 = vadd.f32 %v662, %v734
  %v738 = vxor.u32 %v737, 2147483648
  %v739 = vmul.f32 %v738, 1.442695
  %v740 = vpow.pop %v739
  %v741 = vadd.f32 %v740, 1.0
  %v742 = vrcp.pop %v741
  %v743 = vmul.f32 1.0, %v742
  %v744 = vtanh.pop %v737
  %v745 = vld [vmem:[#allocation4] sm:$0xff]
  %747 = vrot.lane.b32.xlu0 %v745, 32
  %v748 = vpop.permute.xlu0 %747
  %v750 = vmul.f32 %v743, %v748
  %752 = vrot.lane.b32.xlu0 %v744, 64
  %v753 = vpop.permute.xlu0 %752
  %v755 = vmul.f32 %v743, %v753
  %757 = vrot.lane.b32.xlu0 %v755, 32
  %v758 = vpop.permute.xlu0 %757
  %v760 = vadd.f32 %v750, %v758
  %v761 = vtanh.pop %v760
  %763 = vrot.lane.b32.xlu0 %v761, 64
  %v764 = vpop.permute.xlu0 %763
  %v766 = vmul.f32 %v743, %v764
  %768 = vrot.lane.b32.xlu0 %v760, 96
  %v769 = vpop.permute.xlu0 %768
  %771 = vst.msk [vmem:[#allocation4] sm:$0xff] %vm74, %v769
  %773 = vrot.lane.b32.xlu0 %v766, 32
  %v774 = vpop.permute.xlu0 %773
  %776 = vst.msk [vmem:[#allocation3] sm:$0xff] %vm74, %v774
  %s777 = scalar_lea.vmem %s2, 40
  %778 = vst.msk [vmem:[%s777] sm:$0xff] %vm74, %v774
  %s779 = scalar_lea.vmem %s0, 48
  %v780 = vld [vmem:[%s779] sm:$0xff]
  %v781 = vld [vmem:[#allocation3] sm:$0xff]
  %v783 = vsel %vm74, %v781, 0
  %785 = vmatprep.subr.mxu0 0.0
  %786 = vmatpush1.msra.mxu0 0.0
  %787 = vmatprep.subr.mxu0 0.0
  %788 = vmatpush1.msra.mxu0 0.0
  %789 = vmatprep.subr.mxu0 0.0
  %790 = vmatpush1.msra.mxu0 0.0
  %791 = vmatprep.subr.mxu0 0.0
  %792 = vmatpush1.msra.mxu0 0.0
  %793 = vmatprep.subr.mxu0 0.0
  %794 = vmatpush1.msra.mxu0 0.0
  %795 = vmatprep.subr.mxu0 0.0
  %796 = vmatpush1.msra.mxu0 0.0
  %797 = vmatprep.subr.mxu0 0.0
  %798 = vmatpush1.msra.mxu0 0.0
  %799 = vmatprep.subr.mxu0 0.0
  %800 = vmatpush1.msra.mxu0 0.0
  %801 = vmatprep.subr.mxu0 0.0
  %802 = vmatpush1.msra.mxu0 0.0
  %803 = vmatprep.subr.mxu0 0.0
  %804 = vmatpush1.msra.mxu0 0.0
  %805 = vmatprep.subr.mxu0 0.0
  %806 = vmatpush1.msra.mxu0 0.0
  %807 = vmatprep.subr.mxu0 0.0
  %808 = vmatpush1.msra.mxu0 0.0
  %809 = vmatprep.subr.mxu0 0.0
  %810 = vmatpush1.msra.mxu0 %v71
  %811 = vmatprep.subr.mxu0 0.0
  %812 = vmatpush1.msra.mxu0 %v70
  %813 = vmatprep.subr.mxu0 0.0
  %814 = vmatpush1.msra.mxu0 %v69
  %815 = vmatprep.subr.mxu0 0.0
  %816 = vmatpush1.msra.mxu0 %v68
  %817 = vmatprep.subr.mxu0 0.0
  %818 = vmatpush2.msra.mxu0 0.0
  %819 = vmatprep.subr.mxu0 0.0
  %820 = vmatpush2.msra.mxu0 0.0
  %821 = vmatprep.subr.mxu0 0.0
  %822 = vmatpush2.msra.mxu0 0.0
  %823 = vmatprep.subr.mxu0 0.0
  %824 = vmatpush2.msra.mxu0 0.0
  %825 = vmatprep.subr.mxu0 0.0
  %826 = vmatpush2.msra.mxu0 0.0
  %827 = vmatprep.subr.mxu0 0.0
  %828 = vmatpush2.msra.mxu0 0.0
  %829 = vmatprep.subr.mxu0 0.0
  %830 = vmatpush2.msra.mxu0 0.0
  %831 = vmatprep.subr.mxu0 0.0
  %832 = vmatpush2.msra.mxu0 0.0
  %833 = vmatprep.subr.mxu0 0.0
  %834 = vmatpush2.msra.mxu0 0.0
  %835 = vmatprep.subr.mxu0 0.0
  %836 = vmatpush2.msra.mxu0 0.0
  %837 = vmatprep.subr.mxu0 0.0
  %838 = vmatpush2.msra.mxu0 0.0
  %839 = vmatprep.subr.mxu0 0.0
  %840 = vmatpush2.msra.mxu0 0.0
  %841 = vmatprep.subr.mxu0 0.0
  %842 = vmatpush2.msra.mxu0 0.0
  %843 = vmatprep.subr.mxu0 0.0
  %844 = vmatpush2.msra.mxu0 0.0
  %845 = vmatprep.subr.mxu0 0.0
  %846 = vmatpush2.msra.mxu0 0.0
  %847 = vmatprep.subr.mxu0 0.0
  %848 = vmatpush2.msra.mxu0 0.0
  %849 = vmatprep.mubr.f32.mxu0 0.0
  %850 = vmatmul.mubr.f32.gmra.mxu0 %v783
  %v851 = vpop.f32.mrf.mxu0
  %v852 = vadd.f32 0.0, %v851
  %v853 = vpop.f32.mrf.mxu0
  %854 = vdwg.mxu0
  %v855 = vadd.f32 %v780, %v852
  %v856 = vxor.u32 %v855, 2147483648
  %v857 = vmul.f32 %v856, 1.442695
  %v858 = vpow.pop %v857
  %v859 = vadd.f32 %v858, 1.0
  %v860 = vrcp.pop %v859
  %v861 = vmul.f32 1.0, %v860
  %v862 = vtanh.pop %v855
  %v863 = vld [vmem:[#allocation4] sm:$0xff]
  %865 = vrot.lane.b32.xlu0 %v863, 32
  %v866 = vpop.permute.xlu0 %865
  %v868 = vmul.f32 %v861, %v866
  %870 = vrot.lane.b32.xlu0 %v862, 64
  %v871 = vpop.permute.xlu0 %870
  %v873 = vmul.f32 %v861, %v871
  %875 = vrot.lane.b32.xlu0 %v873, 32
  %v876 = vpop.permute.xlu0 %875
  %v878 = vadd.f32 %v868, %v876
  %v879 = vtanh.pop %v878
  %881 = vrot.lane.b32.xlu0 %v879, 64
  %v882 = vpop.permute.xlu0 %881
  %v884 = vmul.f32 %v861, %v882
  %886 = vrot.lane.b32.xlu0 %v878, 96
  %v887 = vpop.permute.xlu0 %886
  %889 = vst.msk [vmem:[#allocation4] sm:$0xff] %vm74, %v887
  %891 = vrot.lane.b32.xlu0 %v884, 32
  %v892 = vpop.permute.xlu0 %891
  %894 = vst.msk [vmem:[#allocation3] sm:$0xff] %vm74, %v892
  %s895 = scalar_lea.vmem %s2, 48
  %896 = vst.msk [vmem:[%s895] sm:$0xff] %vm74, %v892
  %s897 = scalar_lea.vmem %s0, 56
  %v898 = vld [vmem:[%s897] sm:$0xff]
  %v899 = vld [vmem:[#allocation3] sm:$0xff]
  %v901 = vsel %vm74, %v899, 0
  %903 = vmatprep.subr.mxu0 0.0
  %904 = vmatpush1.msra.mxu0 0.0
  %905 = vmatprep.subr.mxu0 0.0
  %906 = vmatpush1.msra.mxu0 0.0
  %907 = vmatprep.subr.mxu0 0.0
  %908 = vmatpush1.msra.mxu0 0.0
  %909 = vmatprep.subr.mxu0 0.0
  %910 = vmatpush1.msra.mxu0 0.0
  %911 = vmatprep.subr.mxu0 0.0
  %912 = vmatpush1.msra.mxu0 0.0
  %913 = vmatprep.subr.mxu0 0.0
  %914 = vmatpush1.msra.mxu0 0.0
  %915 = vmatprep.subr.mxu0 0.0
  %916 = vmatpush1.msra.mxu0 0.0
  %917 = vmatprep.subr.mxu0 0.0
  %918 = vmatpush1.msra.mxu0 0.0
  %919 = vmatprep.subr.mxu0 0.0
  %920 = vmatpush1.msra.mxu0 0.0
  %921 = vmatprep.subr.mxu0 0.0
  %922 = vmatpush1.msra.mxu0 0.0
  %923 = vmatprep.subr.mxu0 0.0
  %924 = vmatpush1.msra.mxu0 0.0
  %925 = vmatprep.subr.mxu0 0.0
  %926 = vmatpush1.msra.mxu0 0.0
  %927 = vmatprep.subr.mxu0 0.0
  %928 = vmatpush1.msra.mxu0 %v71
  %929 = vmatprep.subr.mxu0 0.0
  %930 = vmatpush1.msra.mxu0 %v70
  %931 = vmatprep.subr.mxu0 0.0
  %932 = vmatpush1.msra.mxu0 %v69
  %933 = vmatprep.subr.mxu0 0.0
  %934 = vmatpush1.msra.mxu0 %v68
  %935 = vmatprep.subr.mxu0 0.0
  %936 = vmatpush2.msra.mxu0 0.0
  %937 = vmatprep.subr.mxu0 0.0
  %938 = vmatpush2.msra.mxu0 0.0
  %939 = vmatprep.subr.mxu0 0.0
  %940 = vmatpush2.msra.mxu0 0.0
  %941 = vmatprep.subr.mxu0 0.0
  %942 = vmatpush2.msra.mxu0 0.0
  %943 = vmatprep.subr.mxu0 0.0
  %944 = vmatpush2.msra.mxu0 0.0
  %945 = vmatprep.subr.mxu0 0.0
  %946 = vmatpush2.msra.mxu0 0.0
  %947 = vmatprep.subr.mxu0 0.0
  %948 = vmatpush2.msra.mxu0 0.0
  %949 = vmatprep.subr.mxu0 0.0
  %950 = vmatpush2.msra.mxu0 0.0
  %951 = vmatprep.subr.mxu0 0.0
  %952 = vmatpush2.msra.mxu0 0.0
  %953 = vmatprep.subr.mxu0 0.0
  %954 = vmatpush2.msra.mxu0 0.0
  %955 = vmatprep.subr.mxu0 0.0
  %956 = vmatpush2.msra.mxu0 0.0
  %957 = vmatprep.subr.mxu0 0.0
  %958 = vmatpush2.msra.mxu0 0.0
  %959 = vmatprep.subr.mxu0 0.0
  %960 = vmatpush2.msra.mxu0 0.0
  %961 = vmatprep.subr.mxu0 0.0
  %962 = vmatpush2.msra.mxu0 0.0
  %963 = vmatprep.subr.mxu0 0.0
  %964 = vmatpush2.msra.mxu0 0.0
  %965 = vmatprep.subr.mxu0 0.0
  %966 = vmatpush2.msra.mxu0 0.0
  %967 = vmatprep.mubr.f32.mxu0 0.0
  %968 = vmatmul.mubr.f32.gmra.mxu0 %v901
  %v969 = vpop.f32.mrf.mxu0
  %v970 = vadd.f32 0.0, %v969
  %v971 = vpop.f32.mrf.mxu0
  %972 = vdwg.mxu0
  %v973 = vadd.f32 %v898, %v970
  %v974 = vxor.u32 %v973, 2147483648
  %v975 = vmul.f32 %v974, 1.442695
  %v976 = vpow.pop %v975
  %v977 = vadd.f32 %v976, 1.0
  %v978 = vrcp.pop %v977
  %v979 = vmul.f32 1.0, %v978
  %v980 = vtanh.pop %v973
  %v981 = vld [vmem:[#allocation4] sm:$0xff]
  %983 = vrot.lane.b32.xlu0 %v981, 32
  %v984 = vpop.permute.xlu0 %983
  %v986 = vmul.f32 %v979, %v984
  %988 = vrot.lane.b32.xlu0 %v980, 64
  %v989 = vpop.permute.xlu0 %988
  %v991 = vmul.f32 %v979, %v989
  %993 = vrot.lane.b32.xlu0 %v991, 32
  %v994 = vpop.permute.xlu0 %993
  %v996 = vadd.f32 %v986, %v994
  %v997 = vtanh.pop %v996
  %999 = vrot.lane.b32.xlu0 %v997, 64
  %v1000 = vpop.permute.xlu0 %999
  %v1002 = vmul.f32 %v979, %v1000
  %1004 = vrot.lane.b32.xlu0 %v996, 96
  %v1005 = vpop.permute.xlu0 %1004
  %1007 = vst.msk [vmem:[#allocation4] sm:$0xff] %vm74, %v1005
  %1009 = vrot.lane.b32.xlu0 %v1002, 32
  %v1010 = vpop.permute.xlu0 %1009
  %1012 = vst.msk [vmem:[#allocation3] sm:$0xff] %vm74, %v1010
  %s1013 = scalar_lea.vmem %s2, 56
  %1014 = vst.msk [vmem:[%s1013] sm:$0xff] %vm74, %v1010
  // Predicated region
  $region44: #{forward.8} parent=0 // pred_check
    _
  $region45: #{forward.8} parent=0 // pred_check_branch
    %1016 = sbr.rel (0) target = $region47
  $region46: #{forward.8} parent=0 // pred_region
    _
  $region47: #{forward.8} parent=0 // pred_fallthru
    _
  // Predicated region
  $region48: #{forward.8} parent=0 // pred_check
    _
  $region49: #{forward.8} parent=0 // pred_check_branch
    %1018 = sbr.rel (0) target = $region51
  $region50: #{forward.8} parent=0 // pred_region
    _
  $region51: #{forward.8} parent=0 // pred_fallthru
    _
  %1019 = vsyncmov [#allocation5]
  %s1020 = vpop.sfrf %1019
  %p1021 = scmp.eq.s32.totalorder %s1020, 0
  %p1022 = pneg %p1021
  %1024 = shalt.err (%p1022)

</llo_original>
